<compile_context>
chip_gen: v5e
topology: v5e:2x2
jax: 0.10.0
libtpu: 0.0.40
codegen_flags: <defaults>
</compile_context>

<pallas_src>
import jax
import jax.numpy as jnp
from jax.experimental import pallas as pl
from jax.experimental.pallas import tpu as pltpu


def _round_up(x, m):
    return (x + m - 1) // m * m


def _make_conv_stats_kernel(k, Wpa, C_in, TL, S, n_tiles):
    """Fused-im2col conv (lane-dense, single MXU matmul per tile) + per-part
    BN partial sums (sum / sumsq), written out on the part's last grid step."""

    def kernel(mask_ref, x_ref, w_ref, y_ref, psum_ref, psq_ref,
               patch_sc, sum_sc, sq_sc):
        q = pl.program_id(1)          # image within this part
        j = pl.program_id(2)          # lane tile

        @pl.when((q == 0) & (j == 0))
        def _init():
            sum_sc[...] = jnp.zeros_like(sum_sc)
            sq_sc[...] = jnp.zeros_like(sq_sc)

        # Window of the flattened zero-padded image covering this lane tile
        # plus its halo.  The dynamic start is a multiple of 128; per-tap
        # misalignment is handled by static value slices below.
        if n_tiles == 1:
            xwin = x_ref[0]                                    # (C_in, TL + 2S)
        else:
            off = pl.multiple_of(j * TL, 128)
            xwin = x_ref[0, :, pl.ds(off, TL + 2 * S)]         # (C_in, TL + 2S)

        # im2col in VMEM only: build the (k*k*C_in, TL) patch stack from the
        # k*k shifted slices (f32 staging -> plain masked 32-bit sublane stores).
        for dy in range(k):
            for dx in range(k):
                t = dy * k + dx
                shift = dy * Wpa + dx                          # in [0, 2S]
                patch_sc[t * C_in:(t + 1) * C_in, :] = (
                    xwin[:, shift:shift + TL].astype(jnp.float32))

        # One MXU matmul over the full K = k*k*C_in contraction,
        # bf16 operands, f32 accumulation.
        acc = jnp.dot(w_ref[...], patch_sc[...].astype(jnp.bfloat16),
                      preferred_element_type=jnp.float32)      # (C_out, TL)
        y_ref[0] = acc.astype(jnp.bfloat16)

        # Masked per-channel statistics (mask zeroes padded-border lanes);
        # lane (XLU) reductions in f32.
        ym = acc * mask_ref[...]                               # (C_out, TL)
        sum_sc[...] += jnp.sum(ym, axis=1, keepdims=True)
        sq_sc[...] += jnp.sum(ym * acc, axis=1, keepdims=True)

        @pl.when((q == pl.num_programs(1) - 1) & (j == pl.num_programs(2) - 1))
        def _finalize():
            psum_ref[0] = sum_sc[...]
            psq_ref[0] = sq_sc[...]

    return kernel


def _make_bn_tanh_kernel(num_parts, inv_count, eps):
    """Combine per-part BN partial sums -> mean / inv_std, then
    (y - mean) * inv_std -> tanh on a lane-dense bf16 tile (f32 math, f32 out)."""

    def kernel(y_ref, psum_ref, psq_ref, out_ref):
        s = psum_ref[0]
        sq = psq_ref[0]
        for p in range(1, num_parts):
            s = s + psum_ref[p]
            sq = sq + psq_ref[p]
        mean = s * inv_count                                   # (C_out, 1)
        # TODO(synk): E[x^2]-E[x]^2 can cancel when |mean| >> std; the clamp
        # keeps it finite, but a shifted/Welford accumulation would be sturdier.
        var = jnp.maximum(sq * inv_count - mean * mean, 0.0)
        inv = jax.lax.rsqrt(var + eps)
        out_ref[0] = jnp.tanh((y_ref[0].astype(jnp.float32) - mean) * inv)

    return kernel


def convolution_layer_forward(x_nchw, weight, *, eps=1e-5):
    """Forward pass matching the PyTorch module (weights: (C_out, C_in, k, k))."""
    N, C_in, H, W = x_nchw.shape
    C_out, _, k, _ = weight.shape
    pad = k // 2
    Hp, Wp = H + 2 * pad, W + 2 * pad

    # Lane-align the flattened row stride for large W so the dy tap shifts stay
    # 128-aligned; skip for small W where the padding overhead (Wpa/Wp) is big.
    Wpa = _round_up(Wp, 128) if Wp >= 128 else Wp
    L = Hp * Wpa                      # flattened padded spatial size
    K = k * k * C_in                  # im2col contraction size
    S = pad * (Wpa + 1)               # flattened halo (max tap shift / 2)

    # Lane-tile size: big enough to amortize per-step overhead, small enough
    # that the (K, TL) f32 patch scratch stays a small fraction of VMEM.
    TL_MAX = max(512, min(2048, ((2 << 20) // (4 * K)) // 128 * 128))
    TL = min(TL_MAX, _round_up(L, 128))
    L_out = _round_up(L, TL)          # lane-dense output length
    n_tiles = L_out // TL
    Lp2 = L_out + 2 * S               # flattened input length incl. halo

    # Split the stats pass into 2 parts over the batch (v7x: one per
    # TensorCore via the leading "parallel" axis; no-op on 1-TC chips).
    P = 2 if (N >= 2 and N % 2 == 0) else 1
    NP = N // P

    vmem_limit = 64 * 1024 * 1024     # cap only; tiling keeps usage far below

    # ---- glue: zero-pad (conv pad + row-stride align), flatten, bf16 ----
    xp = jnp.pad(x_nchw, ((0, 0), (0, 0), (pad, pad), (pad, Wpa - W - pad)))
    x_flat = xp.reshape(N, C_in, L)
    x_flat = jnp.pad(x_flat, ((0, 0), (0, 0), (S, Lp2 - L - S)))
    x_flat = x_flat.astype(jnp.bfloat16)                        # (N, C_in, Lp2)

    # weight (C_out, C_in, k, k) -> (C_out, k, k, C_in) -> (C_out, k*k*C_in)
    w2 = jnp.transpose(weight, (0, 2, 3, 1)).reshape(C_out, K).astype(jnp.bfloat16)

    # validity mask over flattened padded lanes (1.0 on interior pixels)
    jj = jnp.arange(L_out)
    hh, ww = jj // Wpa, jj % Wpa
    interior = ((hh >= pad) & (hh < pad + H) &
                (ww >= pad) & (ww < pad + W) & (jj < L))
    mask = interior.astype(jnp.float32)[None, :]                # (1, L_out)

    inv_count = 1.0 / float(N * H * W)

    # ---- kernel 1: fused-im2col conv (one matmul/tile) + per-part BN partials ----
    kernel1 = _make_conv_stats_kernel(k, Wpa, C_in, TL, S, n_tiles)
    y, psum, psq = pl.pallas_call(
        kernel1,
        out_shape=(jax.ShapeDtypeStruct((N, C_out, L_out), jnp.bfloat16),
                   jax.ShapeDtypeStruct((P, C_out, 1), jnp.float32),
                   jax.ShapeDtypeStruct((P, C_out, 1), jnp.float32)),
        grid_spec=pltpu.PrefetchScalarGridSpec(
            num_scalar_prefetch=0,
            grid=(P, NP, n_tiles),
            in_specs=[
                pl.BlockSpec((1, TL), lambda p, q, j: (0, j)),                      # mask
                pl.BlockSpec((1, C_in, Lp2), lambda p, q, j: (p * NP + q, 0, 0)),   # x (resident over tiles)
                pl.BlockSpec((C_out, K), lambda p, q, j: (0, 0)),                   # weights
            ],
            out_specs=(
                pl.BlockSpec((1, C_out, TL), lambda p, q, j: (p * NP + q, 0, j)),   # y (bf16)
                pl.BlockSpec((1, C_out, 1), lambda p, q, j: (p, 0, 0)),             # partial sum
                pl.BlockSpec((1, C_out, 1), lambda p, q, j: (p, 0, 0)),             # partial sumsq
            ),
            scratch_shapes=[pltpu.VMEM((K, TL), jnp.float32),
                            pltpu.VMEM((C_out, 1), jnp.float32),
                            pltpu.VMEM((C_out, 1), jnp.float32)]),
        compiler_params=pltpu.CompilerParams(
            dimension_semantics=("parallel", "arbitrary", "arbitrary"),
            vmem_limit_bytes=vmem_limit),
    )(mask, x_flat, w2)

    # ---- kernel 2: combine partials -> BN normalize + tanh (f32 out) ----
    kernel2 = _make_bn_tanh_kernel(P, float(inv_count), float(eps))
    out_flat = pl.pallas_call(
        kernel2,
        out_shape=jax.ShapeDtypeStruct((N, C_out, L_out), jnp.float32),
        grid_spec=pltpu.PrefetchScalarGridSpec(
            num_scalar_prefetch=0,
            grid=(N, n_tiles),
            in_specs=[
                pl.BlockSpec((1, C_out, TL), lambda n, j: (n, 0, j)),
                pl.BlockSpec((P, C_out, 1), lambda n, j: (0, 0, 0)),
                pl.BlockSpec((P, C_out, 1), lambda n, j: (0, 0, 0)),
            ],
            out_specs=pl.BlockSpec((1, C_out, TL), lambda n, j: (n, 0, j))),
        compiler_params=pltpu.CompilerParams(
            dimension_semantics=("parallel", "parallel"),
            vmem_limit_bytes=vmem_limit),
    )(y, psum, psq)

    # ---- glue: crop the padded border and return NCHW ----
    out = out_flat[:, :, :L].reshape(N, C_out, Hp, Wpa)[:, :, pad:pad + H, pad:pad + W]
    return out


if __name__ == "__main__":
    # Small shapes consistent with the module (batch=2, channels=4, spatial=16).
    N, C_in, C_out, k, H, W = 2, 4, 4, 3, 16, 16
    pad = k // 2

    key = jax.random.PRNGKey(0)
    kx, kw = jax.random.split(key)
    x = jax.random.normal(kx, (N, C_in, H, W), dtype=jnp.float32)

    # Deterministic Conv2d-style weight init (kaiming-uniform-like bound), bias=False.
    fan_in = C_in * k * k
    bound = 1.0 / jnp.sqrt(float(fan_in))
    weight = jax.random.uniform(kw, (C_out, C_in, k, k),
                                minval=-bound, maxval=bound, dtype=jnp.float32)

    fwd = jax.jit(convolution_layer_forward)
    result = fwd(x, weight)
    jax.block_until_ready(result)

    assert result.shape == (N, C_out, H, W)
    assert bool(jnp.all(jnp.isfinite(result)))

    # Pure-JAX f32 reference (Conv2d -> BatchNorm2d(training, gamma=1, beta=0) -> Tanh).
    y_ref = jax.lax.conv_general_dilated(
        x, weight, window_strides=(1, 1), padding=((pad, pad), (pad, pad)),
        dimension_numbers=("NCHW", "OIHW", "NCHW"))
    mu = y_ref.mean(axis=(0, 2, 3), keepdims=True)
    var = y_ref.var(axis=(0, 2, 3), keepdims=True)
    ref = jnp.tanh((y_ref - mu) / jnp.sqrt(var + 1e-5))
    assert bool(jnp.max(jnp.abs(result - ref)) < 5e-2)   # bf16-operand tolerance

    print("KERNEL_OK")
</pallas_src>

<mosaic_0001>
module attributes {stable_mosaic.version = 11 : i64} {
  func.func @kernel(%arg0: i32, %arg1: i32, %arg2: i32, %arg3: memref<1x384xf32, #tpu.memory_space<vmem>>, %arg4: memref<1x4x422xbf16, #tpu.memory_space<vmem>>, %arg5: memref<4x36xbf16, #tpu.memory_space<vmem>>, %arg6: memref<1x4x384xbf16, #tpu.memory_space<vmem>>, %arg7: memref<1x4x1xf32, #tpu.memory_space<vmem>>, %arg8: memref<1x4x1xf32, #tpu.memory_space<vmem>>, %arg9: memref<36x384xf32, #tpu.memory_space<vmem>>, %arg10: memref<4x1xf32, #tpu.memory_space<vmem>>, %arg11: memref<4x1xf32, #tpu.memory_space<vmem>>) attributes {dimension_semantics = [#tpu.dimension_semantics<parallel>, #tpu.dimension_semantics<arbitrary>, #tpu.dimension_semantics<arbitrary>], iteration_bounds = array<i64: 2, 1, 1>, scalar_prefetch = 0 : i64, scratch_operands = 3 : i64, tpu.core_type = #tpu.core_type<tc>, window_params = [{transform_indices = @transform_0, window_bounds = array<i64: 1, 384>}, {transform_indices = @transform_1, window_bounds = array<i64: 1, 4, 422>}, {pipeline_mode = #tpu.pipeline_mode<synchronous>, transform_indices = @transform_2, window_bounds = array<i64: 4, 36>}, {transform_indices = @transform_3, window_bounds = array<i64: 1, 4, 384>}, {transform_indices = @transform_4, window_bounds = array<i64: 1, 4, 1>}, {transform_indices = @transform_5, window_bounds = array<i64: 1, 4, 1>}]} {
    %c0_i32 = arith.constant 0 : i32
    %0 = arith.cmpi eq, %arg1, %c0_i32 : i32
    %c0_i32_0 = arith.constant 0 : i32
    %1 = arith.cmpi eq, %arg2, %c0_i32_0 : i32
    %2 = arith.andi %0, %1 : i1
    %3 = arith.extui %2 : i1 to i32
    %c0_i32_1 = arith.constant 0 : i32
    %4 = arith.cmpi ne, %3, %c0_i32_1 : i32
    scf.if %4 {
      %cst_36 = arith.constant 0.000000e+00 : f32
      %61 = vector.broadcast %cst_36 : f32 to vector<4x1xf32>
      %c0_37 = arith.constant 0 : index
      %c0_38 = arith.constant 0 : index
      %62 = vector.load %arg10[%c0_37, %c0_38] : memref<4x1xf32, #tpu.memory_space<vmem>>, vector<4x1xf32>
      tpu.vector_store %arg10[%c0_37, %c0_38], %61 {strides = array<i32>} : memref<4x1xf32, #tpu.memory_space<vmem>>, vector<4x1xf32>,
      %cst_39 = arith.constant 0.000000e+00 : f32
      %63 = vector.broadcast %cst_39 : f32 to vector<4x1xf32>
      %c0_40 = arith.constant 0 : index
      %c0_41 = arith.constant 0 : index
      %64 = vector.load %arg11[%c0_40, %c0_41] : memref<4x1xf32, #tpu.memory_space<vmem>>, vector<4x1xf32>
      tpu.vector_store %arg11[%c0_40, %c0_41], %63 {strides = array<i32>} : memref<4x1xf32, #tpu.memory_space<vmem>>, vector<4x1xf32>,
    } else {
    }
    %c0 = arith.constant 0 : index
    %c0_2 = arith.constant 0 : index
    %c0_3 = arith.constant 0 : index
    %5 = vector.load %arg4[%c0, %c0_2, %c0_3] : memref<1x4x422xbf16, #tpu.memory_space<vmem>>, vector<1x4x422xbf16>
    %6 = vector.shape_cast %5 : vector<1x4x422xbf16> to vector<4x422xbf16>
    %7 = vector.extract_strided_slice %6 {offsets = [0, 0], sizes = [4, 384], strides = [1, 1]} : vector<4x422xbf16> to vector<4x384xbf16>
    %8 = arith.extf %7 : vector<4x384xbf16> to vector<4x384xf32>
    %c0_4 = arith.constant 0 : index
    %c0_5 = arith.constant 0 : index
    %9 = vector.load %arg9[%c0_4, %c0_5] : memref<36x384xf32, #tpu.memory_space<vmem>>, vector<4x384xf32>
    tpu.vector_store %arg9[%c0_4, %c0_5], %8 {strides = array<i32>} : memref<36x384xf32, #tpu.memory_space<vmem>>, vector<4x384xf32>,
    %10 = vector.extract_strided_slice %6 {offsets = [0, 1], sizes = [4, 384], strides = [1, 1]} : vector<4x422xbf16> to vector<4x384xbf16>
    %11 = arith.extf %10 : vector<4x384xbf16> to vector<4x384xf32>
    %c4 = arith.constant 4 : index
    %c0_6 = arith.constant 0 : index
    %12 = vector.load %arg9[%c4, %c0_6] : memref<36x384xf32, #tpu.memory_space<vmem>>, vector<4x384xf32>
    tpu.vector_store %arg9[%c4, %c0_6], %11 {strides = array<i32>} : memref<36x384xf32, #tpu.memory_space<vmem>>, vector<4x384xf32>,
    %13 = vector.extract_strided_slice %6 {offsets = [0, 2], sizes = [4, 384], strides = [1, 1]} : vector<4x422xbf16> to vector<4x384xbf16>
    %14 = arith.extf %13 : vector<4x384xbf16> to vector<4x384xf32>
    %c8 = arith.constant 8 : index
    %c0_7 = arith.constant 0 : index
    %15 = vector.load %arg9[%c8, %c0_7] : memref<36x384xf32, #tpu.memory_space<vmem>>, vector<4x384xf32>
    tpu.vector_store %arg9[%c8, %c0_7], %14 {strides = array<i32>} : memref<36x384xf32, #tpu.memory_space<vmem>>, vector<4x384xf32>,
    %16 = vector.extract_strided_slice %6 {offsets = [0, 18], sizes = [4, 384], strides = [1, 1]} : vector<4x422xbf16> to vector<4x384xbf16>
    %17 = arith.extf %16 : vector<4x384xbf16> to vector<4x384xf32>
    %c12 = arith.constant 12 : index
    %c0_8 = arith.constant 0 : index
    %18 = vector.load %arg9[%c12, %c0_8] : memref<36x384xf32, #tpu.memory_space<vmem>>, vector<4x384xf32>
    tpu.vector_store %arg9[%c12, %c0_8], %17 {strides = array<i32>} : memref<36x384xf32, #tpu.memory_space<vmem>>, vector<4x384xf32>,
    %19 = vector.extract_strided_slice %6 {offsets = [0, 19], sizes = [4, 384], strides = [1, 1]} : vector<4x422xbf16> to vector<4x384xbf16>
    %20 = arith.extf %19 : vector<4x384xbf16> to vector<4x384xf32>
    %c16 = arith.constant 16 : index
    %c0_9 = arith.constant 0 : index
    %21 = vector.load %arg9[%c16, %c0_9] : memref<36x384xf32, #tpu.memory_space<vmem>>, vector<4x384xf32>
    tpu.vector_store %arg9[%c16, %c0_9], %20 {strides = array<i32>} : memref<36x384xf32, #tpu.memory_space<vmem>>, vector<4x384xf32>,
    %22 = vector.extract_strided_slice %6 {offsets = [0, 20], sizes = [4, 384], strides = [1, 1]} : vector<4x422xbf16> to vector<4x384xbf16>
    %23 = arith.extf %22 : vector<4x384xbf16> to vector<4x384xf32>
    %c20 = arith.constant 20 : index
    %c0_10 = arith.constant 0 : index
    %24 = vector.load %arg9[%c20, %c0_10] : memref<36x384xf32, #tpu.memory_space<vmem>>, vector<4x384xf32>
    tpu.vector_store %arg9[%c20, %c0_10], %23 {strides = array<i32>} : memref<36x384xf32, #tpu.memory_space<vmem>>, vector<4x384xf32>,
    %25 = vector.extract_strided_slice %6 {offsets = [0, 36], sizes = [4, 384], strides = [1, 1]} : vector<4x422xbf16> to vector<4x384xbf16>
    %26 = arith.extf %25 : vector<4x384xbf16> to vector<4x384xf32>
    %c24 = arith.constant 24 : index
    %c0_11 = arith.constant 0 : index
    %27 = vector.load %arg9[%c24, %c0_11] : memref<36x384xf32, #tpu.memory_space<vmem>>, vector<4x384xf32>
    tpu.vector_store %arg9[%c24, %c0_11], %26 {strides = array<i32>} : memref<36x384xf32, #tpu.memory_space<vmem>>, vector<4x384xf32>,
    %28 = vector.extract_strided_slice %6 {offsets = [0, 37], sizes = [4, 384], strides = [1, 1]} : vector<4x422xbf16> to vector<4x384xbf16>
    %29 = arith.extf %28 : vector<4x384xbf16> to vector<4x384xf32>
    %c28 = arith.constant 28 : index
    %c0_12 = arith.constant 0 : index
    %30 = vector.load %arg9[%c28, %c0_12] : memref<36x384xf32, #tpu.memory_space<vmem>>, vector<4x384xf32>
    tpu.vector_store %arg9[%c28, %c0_12], %29 {strides = array<i32>} : memref<36x384xf32, #tpu.memory_space<vmem>>, vector<4x384xf32>,
    %31 = vector.extract_strided_slice %6 {offsets = [0, 38], sizes = [4, 384], strides = [1, 1]} : vector<4x422xbf16> to vector<4x384xbf16>
    %32 = arith.extf %31 : vector<4x384xbf16> to vector<4x384xf32>
    %c32 = arith.constant 32 : index
    %c0_13 = arith.constant 0 : index
    %33 = vector.load %arg9[%c32, %c0_13] : memref<36x384xf32, #tpu.memory_space<vmem>>, vector<4x384xf32>
    tpu.vector_store %arg9[%c32, %c0_13], %32 {strides = array<i32>} : memref<36x384xf32, #tpu.memory_space<vmem>>, vector<4x384xf32>,
    %c0_14 = arith.constant 0 : index
    %c0_15 = arith.constant 0 : index
    %34 = vector.load %arg5[%c0_14, %c0_15] : memref<4x36xbf16, #tpu.memory_space<vmem>>, vector<4x36xbf16>
    %c0_16 = arith.constant 0 : index
    %c0_17 = arith.constant 0 : index
    %35 = vector.load %arg9[%c0_16, %c0_17] : memref<36x384xf32, #tpu.memory_space<vmem>>, vector<36x384xf32>
    %36 = arith.truncf %35 : vector<36x384xf32> to vector<36x384xbf16>
    %cst = arith.constant dense<0.000000e+00> : vector<4x384xf32>
    %37 = tpu.matmul %34, %36, %cst {dimension_numbers = #tpu.dot_dimension_numbers<[1], [0], [0], [1], [0, 0, 1, 1], [], []>} : vector<4x36xbf16>, vector<36x384xbf16>, vector<4x384xf32> -> vector<4x384xf32>
    %38 = arith.truncf %37 : vector<4x384xf32> to vector<4x384xbf16>
    %c0_18 = arith.constant 0 : index
    %c0_19 = arith.constant 0 : index
    %c0_20 = arith.constant 0 : index
    %39 = vector.load %arg6[%c0_18, %c0_19, %c0_20] : memref<1x4x384xbf16, #tpu.memory_space<vmem>>, vector<1x4x384xbf16>
    %40 = vector.shape_cast %39 : vector<1x4x384xbf16> to vector<4x384xbf16>
    %41 = vector.shape_cast %38 : vector<4x384xbf16> to vector<1x4x384xbf16>
    tpu.vector_store %arg6[%c0_18, %c0_19, %c0_20], %41 {strides = array<i32>} : memref<1x4x384xbf16, #tpu.memory_space<vmem>>, vector<1x4x384xbf16>,
    %c0_21 = arith.constant 0 : index
    %c0_22 = arith.constant 0 : index
    %42 = vector.load %arg3[%c0_21, %c0_22] : memref<1x384xf32, #tpu.memory_space<vmem>>, vector<1x384xf32>
    %43 = vector.broadcast %42 : vector<1x384xf32> to vector<4x384xf32>
    %44 = arith.mulf %37, %43 : vector<4x384xf32>
    %c0_23 = arith.constant 0 : index
    %c0_24 = arith.constant 0 : index
    %45 = vector.load %arg10[%c0_23, %c0_24] : memref<4x1xf32, #tpu.memory_space<vmem>>, vector<4x1xf32>
    %cst_25 = arith.constant dense<0.000000e+00> : vector<4xf32>
    %46 = vector.multi_reduction <add>, %44, %cst_25 [1] : vector<4x384xf32> to vector<4xf32>
    %47 = vector.shape_cast %46 : vector<4xf32> to vector<4x1xf32>
    %48 = arith.addf %45, %47 : vector<4x1xf32>
    %c0_26 = arith.constant 0 : index
    %c0_27 = arith.constant 0 : index
    %49 = vector.load %arg10[%c0_26, %c0_27] : memref<4x1xf32, #tpu.memory_space<vmem>>, vector<4x1xf32>
    tpu.vector_store %arg10[%c0_26, %c0_27], %48 {strides = array<i32>} : memref<4x1xf32, #tpu.memory_space<vmem>>, vector<4x1xf32>,
    %c0_28 = arith.constant 0 : index
    %c0_29 = arith.constant 0 : index
    %50 = vector.load %arg11[%c0_28, %c0_29] : memref<4x1xf32, #tpu.memory_space<vmem>>, vector<4x1xf32>
    %51 = arith.mulf %44, %37 : vector<4x384xf32>
    %cst_30 = arith.constant dense<0.000000e+00> : vector<4xf32>
    %52 = vector.multi_reduction <add>, %51, %cst_30 [1] : vector<4x384xf32> to vector<4xf32>
    %53 = vector.shape_cast %52 : vector<4xf32> to vector<4x1xf32>
    %54 = arith.addf %50, %53 : vector<4x1xf32>
    %c0_31 = arith.constant 0 : index
    %c0_32 = arith.constant 0 : index
    %55 = vector.load %arg11[%c0_31, %c0_32] : memref<4x1xf32, #tpu.memory_space<vmem>>, vector<4x1xf32>
    tpu.vector_store %arg11[%c0_31, %c0_32], %54 {strides = array<i32>} : memref<4x1xf32, #tpu.memory_space<vmem>>, vector<4x1xf32>,
    %c0_i32_33 = arith.constant 0 : i32
    %56 = arith.cmpi eq, %arg1, %c0_i32_33 : i32
    %c0_i32_34 = arith.constant 0 : i32
    %57 = arith.cmpi eq, %arg2, %c0_i32_34 : i32
    %58 = arith.andi %56, %57 : i1
    %59 = arith.extui %58 : i1 to i32
    %c0_i32_35 = arith.constant 0 : i32
    %60 = arith.cmpi ne, %59, %c0_i32_35 : i32
    scf.if %60 {
      %c0_36 = arith.constant 0 : index
      %c0_37 = arith.constant 0 : index
      %61 = vector.load %arg10[%c0_36, %c0_37] : memref<4x1xf32, #tpu.memory_space<vmem>>, vector<4x1xf32>
      %c0_38 = arith.constant 0 : index
      %c0_39 = arith.constant 0 : index
      %c0_40 = arith.constant 0 : index
      %62 = vector.load %arg7[%c0_38, %c0_39, %c0_40] : memref<1x4x1xf32, #tpu.memory_space<vmem>>, vector<1x4x1xf32>
      %63 = vector.shape_cast %62 : vector<1x4x1xf32> to vector<4x1xf32>
      %64 = vector.shape_cast %61 : vector<4x1xf32> to vector<1x4x1xf32>
      tpu.vector_store %arg7[%c0_38, %c0_39, %c0_40], %64 {strides = array<i32>} : memref<1x4x1xf32, #tpu.memory_space<vmem>>, vector<1x4x1xf32>,
      %c0_41 = arith.constant 0 : index
      %c0_42 = arith.constant 0 : index
      %65 = vector.load %arg11[%c0_41, %c0_42] : memref<4x1xf32, #tpu.memory_space<vmem>>, vector<4x1xf32>
      %c0_43 = arith.constant 0 : index
      %c0_44 = arith.constant 0 : index
      %c0_45 = arith.constant 0 : index
      %66 = vector.load %arg8[%c0_43, %c0_44, %c0_45] : memref<1x4x1xf32, #tpu.memory_space<vmem>>, vector<1x4x1xf32>
      %67 = vector.shape_cast %66 : vector<1x4x1xf32> to vector<4x1xf32>
      %68 = vector.shape_cast %65 : vector<4x1xf32> to vector<1x4x1xf32>
      tpu.vector_store %arg8[%c0_43, %c0_44, %c0_45], %68 {strides = array<i32>} : memref<1x4x1xf32, #tpu.memory_space<vmem>>, vector<1x4x1xf32>,
    } else {
    }
    return
  }
  func.func @transform_0(%arg0: i32, %arg1: i32, %arg2: i32) -> (i32, i32) {
    %c0_i32 = arith.constant 0 : i32
    %c0_i32_0 = arith.constant 0 : i32
    return %c0_i32, %arg2 : i32, i32
  }
  func.func @transform_1(%arg0: i32, %arg1: i32, %arg2: i32) -> (i32, i32, i32) {
    %c1_i32 = arith.constant 1 : i32
    %0 = arith.muli %arg0, %c1_i32 : i32
    %1 = arith.addi %0, %arg1 : i32
    %c0_i32 = arith.constant 0 : i32
    %c0_i32_0 = arith.constant 0 : i32
    %c0_i32_1 = arith.constant 0 : i32
    return %1, %c0_i32, %c0_i32_0 : i32, i32, i32
  }
  func.func @transform_2(%arg0: i32, %arg1: i32, %arg2: i32) -> (i32, i32) {
    %c0_i32 = arith.constant 0 : i32
    %c0_i32_0 = arith.constant 0 : i32
    %c0_i32_1 = arith.constant 0 : i32
    return %c0_i32, %c0_i32_0 : i32, i32
  }
  func.func @transform_3(%arg0: i32, %arg1: i32, %arg2: i32) -> (i32, i32, i32) {
    %c1_i32 = arith.constant 1 : i32
    %0 = arith.muli %arg0, %c1_i32 : i32
    %1 = arith.addi %0, %arg1 : i32
    %c0_i32 = arith.constant 0 : i32
    %c0_i32_0 = arith.constant 0 : i32
    return %1, %c0_i32, %arg2 : i32, i32, i32
  }
  func.func @transform_4(%arg0: i32, %arg1: i32, %arg2: i32) -> (i32, i32, i32) {
    %c0_i32 = arith.constant 0 : i32
    %c0_i32_0 = arith.constant 0 : i32
    %c0_i32_1 = arith.constant 0 : i32
    return %arg0, %c0_i32, %c0_i32_0 : i32, i32, i32
  }
  func.func @transform_5(%arg0: i32, %arg1: i32, %arg2: i32) -> (i32, i32, i32) {
    %c0_i32 = arith.constant 0 : i32
    %c0_i32_0 = arith.constant 0 : i32
    %c0_i32_1 = arith.constant 0 : i32
    return %arg0, %c0_i32, %c0_i32_0 : i32, i32, i32
  }
}

module attributes {stable_mosaic.version = 11 : i64} {
  func.func @kernel(%arg0: i32, %arg1: i32, %arg2: memref<1x4x384xbf16, #tpu.memory_space<vmem>>, %arg3: memref<2x4x1xf32, #tpu.memory_space<vmem>>, %arg4: memref<2x4x1xf32, #tpu.memory_space<vmem>>, %arg5: memref<1x4x384xf32, #tpu.memory_space<vmem>>) attributes {dimension_semantics = [#tpu.dimension_semantics<parallel>, #tpu.dimension_semantics<parallel>], iteration_bounds = array<i64: 2, 1>, scalar_prefetch = 0 : i64, scratch_operands = 0 : i64, tpu.core_type = #tpu.core_type<tc>, window_params = [{transform_indices = @transform_0, window_bounds = array<i64: 1, 4, 384>}, {pipeline_mode = #tpu.pipeline_mode<synchronous>, transform_indices = @transform_1, window_bounds = array<i64: 2, 4, 1>}, {pipeline_mode = #tpu.pipeline_mode<synchronous>, transform_indices = @transform_2, window_bounds = array<i64: 2, 4, 1>}, {transform_indices = @transform_3, window_bounds = array<i64: 1, 4, 384>}]} {
    %c0 = arith.constant 0 : index
    %c0_0 = arith.constant 0 : index
    %c0_1 = arith.constant 0 : index
    %0 = vector.load %arg3[%c0, %c0_0, %c0_1] : memref<2x4x1xf32, #tpu.memory_space<vmem>>, vector<1x4x1xf32>
    %1 = vector.shape_cast %0 : vector<1x4x1xf32> to vector<4x1xf32>
    %c0_2 = arith.constant 0 : index
    %c0_3 = arith.constant 0 : index
    %c0_4 = arith.constant 0 : index
    %2 = vector.load %arg4[%c0_2, %c0_3, %c0_4] : memref<2x4x1xf32, #tpu.memory_space<vmem>>, vector<1x4x1xf32>
    %3 = vector.shape_cast %2 : vector<1x4x1xf32> to vector<4x1xf32>
    %c1 = arith.constant 1 : index
    %c0_5 = arith.constant 0 : index
    %c0_6 = arith.constant 0 : index
    %4 = vector.load %arg3[%c1, %c0_5, %c0_6] : memref<2x4x1xf32, #tpu.memory_space<vmem>>, vector<1x4x1xf32>
    %5 = vector.shape_cast %4 : vector<1x4x1xf32> to vector<4x1xf32>
    %6 = arith.addf %1, %5 : vector<4x1xf32>
    %c1_7 = arith.constant 1 : index
    %c0_8 = arith.constant 0 : index
    %c0_9 = arith.constant 0 : index
    %7 = vector.load %arg4[%c1_7, %c0_8, %c0_9] : memref<2x4x1xf32, #tpu.memory_space<vmem>>, vector<1x4x1xf32>
    %8 = vector.shape_cast %7 : vector<1x4x1xf32> to vector<4x1xf32>
    %9 = arith.addf %3, %8 : vector<4x1xf32>
    %cst = arith.constant 0.001953125 : f32
    %10 = vector.broadcast %cst : f32 to vector<4x1xf32>
    %11 = arith.mulf %6, %10 : vector<4x1xf32>
    %cst_10 = arith.constant 0.001953125 : f32
    %12 = vector.broadcast %cst_10 : f32 to vector<4x1xf32>
    %13 = arith.mulf %9, %12 : vector<4x1xf32>
    %14 = arith.mulf %11, %11 : vector<4x1xf32>
    %15 = arith.subf %13, %14 : vector<4x1xf32>
    %cst_11 = arith.constant 0.000000e+00 : f32
    %16 = vector.broadcast %cst_11 : f32 to vector<4x1xf32>
    %17 = arith.maximumf %15, %16 : vector<4x1xf32>
    %cst_12 = arith.constant 9.99999974E-6 : f32
    %18 = vector.broadcast %cst_12 : f32 to vector<4x1xf32>
    %19 = arith.addf %17, %18 : vector<4x1xf32>
    %20 = math.rsqrt %19 : vector<4x1xf32>
    %c0_13 = arith.constant 0 : index
    %c0_14 = arith.constant 0 : index
    %c0_15 = arith.constant 0 : index
    %21 = vector.load %arg2[%c0_13, %c0_14, %c0_15] : memref<1x4x384xbf16, #tpu.memory_space<vmem>>, vector<1x4x384xbf16>
    %22 = vector.shape_cast %21 : vector<1x4x384xbf16> to vector<4x384xbf16>
    %23 = arith.extf %22 : vector<4x384xbf16> to vector<4x384xf32>
    %24 = vector.broadcast %11 : vector<4x1xf32> to vector<4x384xf32>
    %25 = arith.subf %23, %24 : vector<4x384xf32>
    %26 = vector.broadcast %20 : vector<4x1xf32> to vector<4x384xf32>
    %27 = arith.mulf %25, %26 : vector<4x384xf32>
    %28 = math.tanh %27 : vector<4x384xf32>
    %c0_16 = arith.constant 0 : index
    %c0_17 = arith.constant 0 : index
    %c0_18 = arith.constant 0 : index
    %29 = vector.load %arg5[%c0_16, %c0_17, %c0_18] : memref<1x4x384xf32, #tpu.memory_space<vmem>>, vector<1x4x384xf32>
    %30 = vector.shape_cast %29 : vector<1x4x384xf32> to vector<4x384xf32>
    %31 = vector.shape_cast %28 : vector<4x384xf32> to vector<1x4x384xf32>
    tpu.vector_store %arg5[%c0_16, %c0_17, %c0_18], %31 {strides = array<i32>} : memref<1x4x384xf32, #tpu.memory_space<vmem>>, vector<1x4x384xf32>,
    return
  }
  func.func @transform_0(%arg0: i32, %arg1: i32) -> (i32, i32, i32) {
    %c0_i32 = arith.constant 0 : i32
    %c0_i32_0 = arith.constant 0 : i32
    return %arg0, %c0_i32, %arg1 : i32, i32, i32
  }
  func.func @transform_1(%arg0: i32, %arg1: i32) -> (i32, i32, i32) {
    %c0_i32 = arith.constant 0 : i32
    %c0_i32_0 = arith.constant 0 : i32
    %c0_i32_1 = arith.constant 0 : i32
    %c0_i32_2 = arith.constant 0 : i32
    return %c0_i32, %c0_i32_0, %c0_i32_1 : i32, i32, i32
  }
  func.func @transform_2(%arg0: i32, %arg1: i32) -> (i32, i32, i32) {
    %c0_i32 = arith.constant 0 : i32
    %c0_i32_0 = arith.constant 0 : i32
    %c0_i32_1 = arith.constant 0 : i32
    %c0_i32_2 = arith.constant 0 : i32
    return %c0_i32, %c0_i32_0, %c0_i32_1 : i32, i32, i32
  }
  func.func @transform_3(%arg0: i32, %arg1: i32) -> (i32, i32, i32) {
    %c0_i32 = arith.constant 0 : i32
    %c0_i32_0 = arith.constant 0 : i32
    return %arg0, %c0_i32, %arg1 : i32, i32, i32
  }
}

</mosaic_0001>

<llo_original>
// kernel: convolution_layer_forward.3
$region0: #{convolution_layer_forward.3}
  #allocation0 [shape = 'u32[]', space=smem, size = 0x4, offset = 0x4, fixed_abs, tag = 'smem constant byte address 0x4 - core index']
  #allocation1 [shape = 'u32[72,128]{1,0:T(1,128)}', space=vmem, size = 0x9000, scoped, tag = 'internal scratch']
  %s0 = inlined_call_operand.vmem [shape: bf16[2,4,384], index: 0, kind: input, shape index: {}]
  %s1 = inlined_call_operand.vmem [shape: f32[2,4,1], index: 1, kind: input, shape index: {}]
  %s2 = inlined_call_operand.vmem [shape: f32[2,4,1], index: 2, kind: input, shape index: {}]
  %s3 = inlined_call_operand.vmem [shape: f32[2,4,384], index: 3, kind: output, shape index: {}]
  %s4 = sld [smem:[#allocation0]]
  $region45: #{convolution_layer_forward.3} parent=0
    _
  %s6 = ssub.s32 1, %s4
  %s7 = scalar_select 0, %s6, %s4
  loop: start=0, step=1, limit=4
  $region2: #{convolution_layer_forward.3} parent=0 // loop_pre_header
    _
  $region3: #{convolution_layer_forward.3} parent=0 // loop_header
    %s9 = sphi 0, %s13
    %p10 = scmp.ge.s32.totalorder %s9, 4
    %s16 = sphi 0, %s28
    %s17 = sphi 0, %s24
    %s18 = sphi 0, %s16
    %s19 = sphi 0, %s17
    %s20 = sphi 0, %s18
    %s21 = sphi 0, %s19
    %s33 = sphi 0, %s35
    %s36 = sphi 0, %s33
    %s37 = sphi 0, %s36
    %s53 = sphi 0, %s37
    %s57 = sphi 0, %s57
    %s59 = sphi 0, %s57
    %s60 = sphi 0, %s59
    %s74 = sphi 0, %s60
    %s78 = sphi 0, %s78
    %s80 = sphi 0, %s78
    %s81 = sphi 0, %s80
    %s95 = sphi 0, %s81
    %s103 = sphi 0, %s105
    %s106 = sphi 0, %s103
    %s107 = sphi 0, %s106
    %s123 = sphi 0, %s107
  $region4: #{convolution_layer_forward.3} parent=0 // loop_header_branch
    %12 = sbr.rel (%p10) target = $region8
  $region5: #{convolution_layer_forward.3} parent=0 // loop_body
    %s14 = ssub.s32 %s9, 1
    %s15 = ssub.s32 %s9, 2
    %s22 = sadd.s32 1, %s17
    %p23 = scmp.ge.s32.totalorder %s22, 1
    %s24 = scalar_select %p23, 0, %s22
    %s25 = sadd.s32 1, %s16
    %s26 = scalar_select %p23, %s25, %s16
    %p27 = scmp.ge.s32.totalorder %s26, 2
    %s28 = scalar_select %p27, 0, %s26
    %s29 = ssub.s32 %s16, %s28
    %s30 = ssub.s32 %s17, %s24
    %s31 = sor.u32 %s29, %s30
    %p32 = scmp.eq.s32.totalorder %s31, 0
    %s34 = sadd.s32 %s33, 1
    %s35 = scalar_select %p32, %s33, %s34
    %p38 = pneg %p32
    %p39 = scmp.eq.s32.totalorder %s9, 1
    %p40 = por %p38, %p39
    %p41 = scmp.ne.s32.totalorder %s33, %s36
    %p42 = scmp.eq.s32.totalorder %s9, 0
    %p43 = por %p41, %p42
    %p44 = scmp.ne.s32.totalorder %s33, %s36
    %p45 = scmp.eq.s32.totalorder %s14, 1
    %p46 = por %p44, %p45
    %p47 = scmp.ne.s32.totalorder %s36, %s37
    %p48 = scmp.eq.s32.totalorder %s14, 0
    %p49 = por %p47, %p48
    %p50 = scmp.ne.s32.totalorder %s36, %s37
    %p51 = scmp.eq.s32.totalorder %s15, 1
    %p52 = por %p50, %p51
    %p54 = scmp.ne.s32.totalorder %s37, %s53
    %p55 = scmp.eq.s32.totalorder %s15, 0
    %p56 = por %p54, %p55
    %s58 = sadd.s32 %s57, 1
    %p61 = scmp.eq.s32.totalorder %s9, 1
    %p62 = scmp.ne.s32.totalorder %s57, %s59
    %p63 = scmp.eq.s32.totalorder %s9, 0
    %p64 = por %p62, %p63
    %p65 = scmp.ne.s32.totalorder %s57, %s59
    %p66 = scmp.eq.s32.totalorder %s14, 1
    %p67 = por %p65, %p66
    %p68 = scmp.ne.s32.totalorder %s59, %s60
    %p69 = scmp.eq.s32.totalorder %s14, 0
    %p70 = por %p68, %p69
    %p71 = scmp.ne.s32.totalorder %s59, %s60
    %p72 = scmp.eq.s32.totalorder %s15, 1
    %p73 = por %p71, %p72
    %p75 = scmp.ne.s32.totalorder %s60, %s74
    %p76 = scmp.eq.s32.totalorder %s15, 0
    %p77 = por %p75, %p76
    %s79 = sadd.s32 %s78, 1
    %p82 = scmp.eq.s32.totalorder %s9, 1
    %p83 = scmp.ne.s32.totalorder %s78, %s80
    %p84 = scmp.eq.s32.totalorder %s9, 0
    %p85 = por %p83, %p84
    %p86 = scmp.ne.s32.totalorder %s78, %s80
    %p87 = scmp.eq.s32.totalorder %s14, 1
    %p88 = por %p86, %p87
    %p89 = scmp.ne.s32.totalorder %s80, %s81
    %p90 = scmp.eq.s32.totalorder %s14, 0
    %p91 = por %p89, %p90
    %p92 = scmp.ne.s32.totalorder %s80, %s81
    %p93 = scmp.eq.s32.totalorder %s15, 1
    %p94 = por %p92, %p93
    %p96 = scmp.ne.s32.totalorder %s81, %s95
    %p97 = scmp.eq.s32.totalorder %s15, 0
    %p98 = por %p96, %p97
    %s99 = ssub.s32 %s16, %s28
    %s100 = ssub.s32 %s17, %s24
    %s101 = sor.u32 %s99, %s100
    %p102 = scmp.eq.s32.totalorder %s101, 0
    %s104 = sadd.s32 %s103, 1
    %s105 = scalar_select %p102, %s103, %s104
    %p108 = pneg %p102
    %p109 = scmp.eq.s32.totalorder %s9, 1
    %p110 = por %p108, %p109
    %p111 = scmp.ne.s32.totalorder %s103, %s106
    %p112 = scmp.eq.s32.totalorder %s9, 0
    %p113 = por %p111, %p112
    %p114 = scmp.ne.s32.totalorder %s103, %s106
    %p115 = scmp.eq.s32.totalorder %s14, 1
    %p116 = por %p114, %p115
    %p117 = scmp.ne.s32.totalorder %s106, %s107
    %p118 = scmp.eq.s32.totalorder %s14, 0
    %p119 = por %p117, %p118
    %p120 = scmp.ne.s32.totalorder %s106, %s107
    %p121 = scmp.eq.s32.totalorder %s15, 1
    %p122 = por %p120, %p121
    %p124 = scmp.ne.s32.totalorder %s107, %s123
    %p125 = scmp.eq.s32.totalorder %s15, 0
    %p126 = por %p124, %p125
    %p127 = scmp.le.s32.totalorder 1, %s9
    %p128 = scmp.lt.s32.totalorder %s9, 3
    %p129 = pnand %p127, %p128
    %p130 = pneg %p129
    // Predicated region
    $region9: #{convolution_layer_forward.3} parent=5 // pred_check
      _
    $region10: #{convolution_layer_forward.3} parent=5 // pred_check_branch
      %132 = sbr.rel (%p129) target = $region12
    $region11: #{convolution_layer_forward.3} parent=5 // pred_region
      %s133 = ssub.s32 %s9, 1
      // Predicated region
      $region13: #{convolution_layer_forward.3} parent=11 // pred_check
        %p134 = pneg %p70
      $region14: #{convolution_layer_forward.3} parent=11 // pred_check_branch
        %136 = sbr.rel (%p134) target = $region16
      $region15: #{convolution_layer_forward.3} parent=11 // pred_region
        _
      $region16: #{convolution_layer_forward.3} parent=11 // pred_fallthru
        _
      // Predicated region
      $region17: #{convolution_layer_forward.3} parent=11 // pred_check
        %p137 = pneg %p91
      $region18: #{convolution_layer_forward.3} parent=11 // pred_check_branch
        %139 = sbr.rel (%p137) target = $region20
      $region19: #{convolution_layer_forward.3} parent=11 // pred_region
        _
      $region20: #{convolution_layer_forward.3} parent=11 // pred_fallthru
        _
    $region12: #{convolution_layer_forward.3} parent=5 // pred_fallthru
      _
    %p140 = scmp.lt.s32.totalorder %s9, 2
    // Predicated region
    $region21: #{convolution_layer_forward.3} parent=5 // pred_check
      %p141 = pneg %p140
    $region22: #{convolution_layer_forward.3} parent=5 // pred_check_branch
      %143 = sbr.rel (%p141) target = $region24
    $region23: #{convolution_layer_forward.3} parent=5 // pred_region
      // Predicated region
      $region25: #{convolution_layer_forward.3} parent=23 // pred_check
        %p144 = pneg %p43
      $region26: #{convolution_layer_forward.3} parent=23 // pred_check_branch
        %146 = sbr.rel (%p144) target = $region28
      $region27: #{convolution_layer_forward.3} parent=23 // pred_region
        %s147 = smul.u32 3, %s17
        %p148 = scmp.lt.s32.totalorder %s16, 1
        %s149 = scalar_select %p148, %s16, 1
        %p150 = scmp.lt.s32.totalorder %s147, 2
        %s151 = scalar_select %p150, %s147, 2
        %s152 = smul.addr %s149, 3
        %s153 = sadd.s32 %s151, %s152
        %s154 = smul.addr %s153, 2
        %s155 = scalar_lea.vmem %s0, %s154
        %s156 = smul.u32 3, %s17
      $region28: #{convolution_layer_forward.3} parent=23 // pred_fallthru
        _
    $region24: #{convolution_layer_forward.3} parent=5 // pred_fallthru
      _
    %p157 = scmp.le.s32.totalorder 1, %s9
    %p158 = scmp.lt.s32.totalorder %s9, 3
    %p159 = pnand %p157, %p158
    %p160 = pneg %p159
    // Predicated region
    $region29: #{convolution_layer_forward.3} parent=5 // pred_check
      _
    $region30: #{convolution_layer_forward.3} parent=5 // pred_check_branch
      %162 = sbr.rel (%p159) target = $region32
    $region31: #{convolution_layer_forward.3} parent=5 // pred_region
      %s163 = ssub.s32 %s9, 1
      %s164 = smul.u32 3, %s19
      %p165 = scmp.lt.s32.totalorder %s18, 1
      %s166 = scalar_select %p165, %s18, 1
      %p167 = scmp.lt.s32.totalorder %s164, 2
      %s168 = scalar_select %p167, %s164, 2
      %s169 = smul.addr %s166, 3
      %s170 = sadd.s32 %s168, %s169
      %s171 = smul.addr %s170, 2
      %s172 = scalar_lea.vmem %s0, %s171
      %p173 = pneg %p49
      %p174 = pneg %p46
      %p175 = pneg %p70
      %p176 = pneg %p67
      %p177 = pneg %p91
      %p178 = pneg %p88
      %p179 = pneg %p119
      %p180 = pneg %p116
      %s181 = smul.u32 3, %s19
      %p182 = scmp.lt.s32.totalorder %s18, 1
      %s183 = scalar_select %p182, %s18, 1
      %p184 = scmp.lt.s32.totalorder %s181, 2
      %s185 = scalar_select %p184, %s181, 2
      %s186 = smul.addr %s183, 3
      %s187 = sadd.s32 %s185, %s186
      %s188 = smul.addr %s187, 4
      %s189 = scalar_lea.vmem %s3, %s188
      %s190 = smul.u32 3, %s19
      %p191 = scmp.lt.s32.totalorder %s18, 1
      %s192 = scalar_select %p191, %s18, 1
      %p193 = scmp.lt.s32.totalorder %s190, 2
      %s194 = scalar_select %p193, %s190, 2
      %s195 = smul.addr %s192, 3
      %s196 = sadd.s32 %s194, %s195
      %s197 = smul.addr %s196, 2
      %s198 = scalar_lea.vmem %s0, %s197
      %s199 = smul.u32 3, %s19
      %s200 = smul.u32 3, %s19
      %p201 = scmp.lt.s32.totalorder %s18, 1
      %s202 = scalar_select %p201, %s18, 1
      %p203 = scmp.lt.s32.totalorder %s200, 2
      %s204 = scalar_select %p203, %s200, 2
      %s205 = smul.addr %s202, 3
      %s206 = sadd.s32 %s204, %s205
      %s207 = smul.addr %s206, 4
      %s208 = scalar_lea.vmem %s3, %s207
      %s209 = smul.u32 3, %s19
      %v210 = vld [vmem:[%s1] sm:$0xf]
      %v211 = vld [vmem:[%s2] sm:$0xf]
      %s212 = scalar_lea.vmem %s1, 4
      %v213 = vld [vmem:[%s212] sm:$0xf]
      %v214 = vadd.f32 %v210, %v213
      %s215 = scalar_lea.vmem %s2, 4
      %v216 = vld [vmem:[%s215] sm:$0xf]
      %v217 = vadd.f32 %v211, %v216
      %v218 = vmul.f32 %v214, 0.001953125
      %v219 = vmul.f32 %v217, 0.001953125
      %v220 = vmul.f32 %v218, %v218
      %v221 = vsub.f32 %v219, %v220
      %v222 = vmax.f32 %v221, 0.0
      %v223 = vadd.f32 %v222, 1e-05
      %v224 = vrsqrt.pop %v223
      %v225 = vmul.f32 %v224, %v223
      %v226 = vmul.f32 %v225, %v224
      %v227 = vmul.f32 0.5, %v226
      %v228 = vsub.f32 1.5, %v227
      %v229 = vmul.f32 %v224, %v228
      %vm230 = vweird.f32 %v223
      %vm231 = vweird.f32 %v224
      %vm232 = vmor %vm230, %vm231
      %v233 = vsel %vm232, %v224, %v229
      %v234 = vld [vmem:[%s198] sm:$0x3f]
      %v235 = vunpack.c.l.bf16 %v234
      %v236 = vunpack.c.h.bf16 %v234
      %238 = vset.pattern.permute.xlu0 0
      %239 = vperm.xlu0 %238, %v218
      %v240 = vpop.permute.xlu0 %239
      %v242 = vunpack.c.l.s4 839922192
      %v243 = vunpack.c.0.s8 %v242
      %v244 = vperm.slane %v240, %v243
      %v246 = vsub.f32 %v235, %v244
      %v247 = vsub.f32 %v236, %v244
      %249 = vset.pattern.permute.xlu0 0
      %250 = vperm.xlu0 %249, %v233
      %v251 = vpop.permute.xlu0 %250
      %v253 = vunpack.c.l.s4 839922192
      %v254 = vunpack.c.0.s8 %v253
      %v255 = vperm.slane %v251, %v254
      %v257 = vmul.f32 %v246, %v255
      %v258 = vmul.f32 %v247, %v255
      %v259 = vtanh.pop %v257
      %v260 = vtanh.pop %v258
      %261 = vst [vmem:[%s208] sm:$0xff] %v259
      %262 = vst [vmem:[%s208 + $0x8] sm:$0xf] %v260
      %s263 = smul.u32 3, %s19
      %p264 = scmp.lt.s32.totalorder %s18, 1
      %s265 = scalar_select %p264, %s18, 1
      %p266 = scmp.lt.s32.totalorder %s263, 2
      %s267 = scalar_select %p266, %s263, 2
      %s268 = smul.addr %s265, 3
      %s269 = sadd.s32 %s267, %s268
      %s270 = smul.addr %s269, 4
      %s271 = scalar_lea.vmem %s3, %s270
      // Predicated region
      $region33: #{convolution_layer_forward.3} parent=31 // pred_check
        %p272 = pneg %p116
      $region34: #{convolution_layer_forward.3} parent=31 // pred_check_branch
        %274 = sbr.rel (%p272) target = $region36
      $region35: #{convolution_layer_forward.3} parent=31 // pred_region
        %s275 = smul.u32 3, %s19
      $region36: #{convolution_layer_forward.3} parent=31 // pred_fallthru
        _
    $region32: #{convolution_layer_forward.3} parent=5 // pred_fallthru
      _
    %p276 = scmp.le.s32.totalorder 2, %s9
    // Predicated region
    $region37: #{convolution_layer_forward.3} parent=5 // pred_check
      %p277 = pneg %p276
    $region38: #{convolution_layer_forward.3} parent=5 // pred_check_branch
      %279 = sbr.rel (%p277) target = $region40
    $region39: #{convolution_layer_forward.3} parent=5 // pred_region
      %s280 = ssub.s32 %s9, 2
      // Predicated region
      $region41: #{convolution_layer_forward.3} parent=39 // pred_check
        %p281 = pneg %p122
      $region42: #{convolution_layer_forward.3} parent=39 // pred_check_branch
        %283 = sbr.rel (%p281) target = $region44
      $region43: #{convolution_layer_forward.3} parent=39 // pred_region
        %s284 = smul.u32 3, %s21
        %p285 = scmp.lt.s32.totalorder %s20, 1
        %s286 = scalar_select %p285, %s20, 1
        %p287 = scmp.lt.s32.totalorder %s284, 2
        %s288 = scalar_select %p287, %s284, 2
        %s289 = smul.addr %s286, 3
        %s290 = sadd.s32 %s288, %s289
        %s291 = smul.addr %s290, 4
        %s292 = scalar_lea.vmem %s3, %s291
      $region44: #{convolution_layer_forward.3} parent=39 // pred_fallthru
        _
    $region40: #{convolution_layer_forward.3} parent=5 // pred_fallthru
      _
  $region6: #{convolution_layer_forward.3} parent=0 // loop_footer
    %s13 = sadd.s32 1, %s9
  $region7: #{convolution_layer_forward.3} parent=0 // loop_footer_branch
    %8 = sbr.rel target = $region3
  $region8: #{convolution_layer_forward.3} parent=0 // loop_exit
    _

// kernel: convolution_layer_forward.2
$region0: #{convolution_layer_forward.2}
  #allocation0 [shape = 'u32[]', space=smem, size = 0x4, offset = 0x4, fixed_abs, tag = 'smem constant byte address 0x4 - core index']
  #allocation1 [shape = 'u32[72,128]{1,0:T(1,128)}', space=vmem, size = 0x9000, scoped, tag = 'internal scratch']
  #allocation2 [shape = 'f32[36,384]{1,0:T(8,128)}', space=vmem, size = 0xf000, scoped, tag = 'scratch operand']
  #allocation3 [shape = 'f32[4,1]{1,0:T(4,128)}', space=vmem, size = 0x800, scoped, tag = 'scratch operand']
  #allocation4 [shape = 'f32[4,1]{1,0:T(4,128)}', space=vmem, size = 0x800, scoped, tag = 'scratch operand']
  %s0 = inlined_call_operand.vmem [shape: f32[1,384], index: 0, kind: input, shape index: {}]
  %s1 = inlined_call_operand.vmem [shape: bf16[2,4,422], index: 1, kind: input, shape index: {}]
  %s2 = inlined_call_operand.vmem [shape: bf16[4,36], index: 2, kind: input, shape index: {}]
  %s3 = inlined_call_operand.vmem [shape: bf16[2,4,384], index: 3, kind: output, shape index: {0}]
  %s4 = inlined_call_operand.vmem [shape: f32[2,4,1], index: 4, kind: output, shape index: {1}]
  %s5 = inlined_call_operand.vmem [shape: f32[2,4,1], index: 5, kind: output, shape index: {2}]
  %6 = xla_tuple %s3, %s4, %s5
  %s7 = sld [smem:[#allocation0]]
  $region69: #{convolution_layer_forward.2} parent=0
    _
  %s9 = ssub.s32 1, %s7
  %s10 = scalar_select 0, %s9, %s7
  loop: start=0, step=1, limit=4
  $region2: #{convolution_layer_forward.2} parent=0 // loop_pre_header
    _
  $region3: #{convolution_layer_forward.2} parent=0 // loop_header
    %s12 = sphi 0, %s16
    %p13 = scmp.ge.s32.totalorder %s12, 4
    %s19 = sphi 0, %s38
    %s20 = sphi 0, %s34
    %s21 = sphi 0, %s30
    %s22 = sphi 0, %s19
    %s23 = sphi 0, %s20
    %s24 = sphi 0, %s21
    %s25 = sphi 0, %s22
    %s26 = sphi 0, %s23
    %s27 = sphi 0, %s24
    %s41 = sphi 0, %s43
    %s44 = sphi 0, %s41
    %s45 = sphi 0, %s44
    %s61 = sphi 0, %s45
    %s69 = sphi 0, %s71
    %s72 = sphi 0, %s69
    %s73 = sphi 0, %s72
    %s89 = sphi 0, %s73
    %s93 = sphi 0, %s93
    %s95 = sphi 0, %s93
    %s96 = sphi 0, %s95
    %s110 = sphi 0, %s96
    %s120 = sphi 0, %s122
    %s123 = sphi 0, %s120
    %s124 = sphi 0, %s123
    %s140 = sphi 0, %s124
    %s146 = sphi 0, %s148
    %s149 = sphi 0, %s146
    %s150 = sphi 0, %s149
    %s166 = sphi 0, %s150
    %s172 = sphi 0, %s174
    %s175 = sphi 0, %s172
    %s176 = sphi 0, %s175
    %s192 = sphi 0, %s176
  $region4: #{convolution_layer_forward.2} parent=0 // loop_header_branch
    %15 = sbr.rel (%p13) target = $region8
  $region5: #{convolution_layer_forward.2} parent=0 // loop_body
    %s17 = ssub.s32 %s12, 1
    %s18 = ssub.s32 %s12, 2
    %s28 = sadd.s32 1, %s21
    %p29 = scmp.ge.s32.totalorder %s28, 1
    %s30 = scalar_select %p29, 0, %s28
    %s31 = sadd.s32 1, %s20
    %s32 = scalar_select %p29, %s31, %s20
    %p33 = scmp.ge.s32.totalorder %s32, 1
    %s34 = scalar_select %p33, 0, %s32
    %s35 = sadd.s32 1, %s19
    %s36 = scalar_select %p33, %s35, %s19
    %p37 = scmp.ge.s32.totalorder %s36, 2
    %s38 = scalar_select %p37, 0, %s36
    %s39 = ssub.s32 %s21, %s30
    %p40 = scmp.eq.s32.totalorder %s39, 0
    %s42 = sadd.s32 %s41, 1
    %s43 = scalar_select %p40, %s41, %s42
    %p46 = pneg %p40
    %p47 = scmp.eq.s32.totalorder %s12, 1
    %p48 = por %p46, %p47
    %p49 = scmp.ne.s32.totalorder %s41, %s44
    %p50 = scmp.eq.s32.totalorder %s12, 0
    %p51 = por %p49, %p50
    %p52 = scmp.ne.s32.totalorder %s41, %s44
    %p53 = scmp.eq.s32.totalorder %s17, 1
    %p54 = por %p52, %p53
    %p55 = scmp.ne.s32.totalorder %s44, %s45
    %p56 = scmp.eq.s32.totalorder %s17, 0
    %p57 = por %p55, %p56
    %p58 = scmp.ne.s32.totalorder %s44, %s45
    %p59 = scmp.eq.s32.totalorder %s18, 1
    %p60 = por %p58, %p59
    %p62 = scmp.ne.s32.totalorder %s45, %s61
    %p63 = scmp.eq.s32.totalorder %s18, 0
    %p64 = por %p62, %p63
    %s65 = sadd.s32 %s19, %s20
    %s66 = sadd.s32 %s38, %s34
    %s67 = ssub.s32 %s65, %s66
    %p68 = scmp.eq.s32.totalorder %s67, 0
    %s70 = sadd.s32 %s69, 1
    %s71 = scalar_select %p68, %s69, %s70
    %p74 = pneg %p68
    %p75 = scmp.eq.s32.totalorder %s12, 1
    %p76 = por %p74, %p75
    %p77 = scmp.ne.s32.totalorder %s69, %s72
    %p78 = scmp.eq.s32.totalorder %s12, 0
    %p79 = por %p77, %p78
    %p80 = scmp.ne.s32.totalorder %s69, %s72
    %p81 = scmp.eq.s32.totalorder %s17, 1
    %p82 = por %p80, %p81
    %p83 = scmp.ne.s32.totalorder %s72, %s73
    %p84 = scmp.eq.s32.totalorder %s17, 0
    %p85 = por %p83, %p84
    %p86 = scmp.ne.s32.totalorder %s72, %s73
    %p87 = scmp.eq.s32.totalorder %s18, 1
    %p88 = por %p86, %p87
    %p90 = scmp.ne.s32.totalorder %s73, %s89
    %p91 = scmp.eq.s32.totalorder %s18, 0
    %p92 = por %p90, %p91
    %s94 = sadd.s32 %s93, 1
    %p97 = scmp.eq.s32.totalorder %s12, 1
    %p98 = scmp.ne.s32.totalorder %s93, %s95
    %p99 = scmp.eq.s32.totalorder %s12, 0
    %p100 = por %p98, %p99
    %p101 = scmp.ne.s32.totalorder %s93, %s95
    %p102 = scmp.eq.s32.totalorder %s17, 1
    %p103 = por %p101, %p102
    %p104 = scmp.ne.s32.totalorder %s95, %s96
    %p105 = scmp.eq.s32.totalorder %s17, 0
    %p106 = por %p104, %p105
    %p107 = scmp.ne.s32.totalorder %s95, %s96
    %p108 = scmp.eq.s32.totalorder %s18, 1
    %p109 = por %p107, %p108
    %p111 = scmp.ne.s32.totalorder %s96, %s110
    %p112 = scmp.eq.s32.totalorder %s18, 0
    %p113 = por %p111, %p112
    %s114 = sadd.s32 %s19, %s20
    %s115 = sadd.s32 %s38, %s34
    %s116 = ssub.s32 %s114, %s115
    %s117 = ssub.s32 %s21, %s30
    %s118 = sor.u32 %s116, %s117
    %p119 = scmp.eq.s32.totalorder %s118, 0
    %s121 = sadd.s32 %s120, 1
    %s122 = scalar_select %p119, %s120, %s121
    %p125 = pneg %p119
    %p126 = scmp.eq.s32.totalorder %s12, 1
    %p127 = por %p125, %p126
    %p128 = scmp.ne.s32.totalorder %s120, %s123
    %p129 = scmp.eq.s32.totalorder %s12, 0
    %p130 = por %p128, %p129
    %p131 = scmp.ne.s32.totalorder %s120, %s123
    %p132 = scmp.eq.s32.totalorder %s17, 1
    %p133 = por %p131, %p132
    %p134 = scmp.ne.s32.totalorder %s123, %s124
    %p135 = scmp.eq.s32.totalorder %s17, 0
    %p136 = por %p134, %p135
    %p137 = scmp.ne.s32.totalorder %s123, %s124
    %p138 = scmp.eq.s32.totalorder %s18, 1
    %p139 = por %p137, %p138
    %p141 = scmp.ne.s32.totalorder %s124, %s140
    %p142 = scmp.eq.s32.totalorder %s18, 0
    %p143 = por %p141, %p142
    %s144 = ssub.s32 %s19, %s38
    %p145 = scmp.eq.s32.totalorder %s144, 0
    %s147 = sadd.s32 %s146, 1
    %s148 = scalar_select %p145, %s146, %s147
    %p151 = pneg %p145
    %p152 = scmp.eq.s32.totalorder %s12, 1
    %p153 = por %p151, %p152
    %p154 = scmp.ne.s32.totalorder %s146, %s149
    %p155 = scmp.eq.s32.totalorder %s12, 0
    %p156 = por %p154, %p155
    %p157 = scmp.ne.s32.totalorder %s146, %s149
    %p158 = scmp.eq.s32.totalorder %s17, 1
    %p159 = por %p157, %p158
    %p160 = scmp.ne.s32.totalorder %s149, %s150
    %p161 = scmp.eq.s32.totalorder %s17, 0
    %p162 = por %p160, %p161
    %p163 = scmp.ne.s32.totalorder %s149, %s150
    %p164 = scmp.eq.s32.totalorder %s18, 1
    %p165 = por %p163, %p164
    %p167 = scmp.ne.s32.totalorder %s150, %s166
    %p168 = scmp.eq.s32.totalorder %s18, 0
    %p169 = por %p167, %p168
    %s170 = ssub.s32 %s19, %s38
    %p171 = scmp.eq.s32.totalorder %s170, 0
    %s173 = sadd.s32 %s172, 1
    %s174 = scalar_select %p171, %s172, %s173
    %p177 = pneg %p171
    %p178 = scmp.eq.s32.totalorder %s12, 1
    %p179 = por %p177, %p178
    %p180 = scmp.ne.s32.totalorder %s172, %s175
    %p181 = scmp.eq.s32.totalorder %s12, 0
    %p182 = por %p180, %p181
    %p183 = scmp.ne.s32.totalorder %s172, %s175
    %p184 = scmp.eq.s32.totalorder %s17, 1
    %p185 = por %p183, %p184
    %p186 = scmp.ne.s32.totalorder %s175, %s176
    %p187 = scmp.eq.s32.totalorder %s17, 0
    %p188 = por %p186, %p187
    %p189 = scmp.ne.s32.totalorder %s175, %s176
    %p190 = scmp.eq.s32.totalorder %s18, 1
    %p191 = por %p189, %p190
    %p193 = scmp.ne.s32.totalorder %s176, %s192
    %p194 = scmp.eq.s32.totalorder %s18, 0
    %p195 = por %p193, %p194
    %p196 = scmp.le.s32.totalorder 1, %s12
    %p197 = scmp.lt.s32.totalorder %s12, 3
    %p198 = pnand %p196, %p197
    %p199 = pneg %p198
    // Predicated region
    $region9: #{convolution_layer_forward.2} parent=5 // pred_check
      _
    $region10: #{convolution_layer_forward.2} parent=5 // pred_check_branch
      %201 = sbr.rel (%p198) target = $region12
    $region11: #{convolution_layer_forward.2} parent=5 // pred_region
      %s202 = ssub.s32 %s12, 1
      // Predicated region
      $region13: #{convolution_layer_forward.2} parent=11 // pred_check
        %p203 = pneg %p57
      $region14: #{convolution_layer_forward.2} parent=11 // pred_check_branch
        %205 = sbr.rel (%p203) target = $region16
      $region15: #{convolution_layer_forward.2} parent=11 // pred_region
        %s206 = smul.u32 3, %s24
        %p207 = scmp.lt.s32.totalorder %s206, 2
        %s208 = scalar_select %p207, %s206, 2
        %s209 = scalar_lea.vmem %s0, %s208
        %s210 = smul.u32 3, %s24
      $region16: #{convolution_layer_forward.2} parent=11 // pred_fallthru
        _
      // Predicated region
      $region17: #{convolution_layer_forward.2} parent=11 // pred_check
        %p211 = pneg %p106
      $region18: #{convolution_layer_forward.2} parent=11 // pred_check_branch
        %213 = sbr.rel (%p211) target = $region20
      $region19: #{convolution_layer_forward.2} parent=11 // pred_region
        _
      $region20: #{convolution_layer_forward.2} parent=11 // pred_fallthru
        _
    $region12: #{convolution_layer_forward.2} parent=5 // pred_fallthru
      _
    %p214 = scmp.lt.s32.totalorder %s12, 2
    // Predicated region
    $region21: #{convolution_layer_forward.2} parent=5 // pred_check
      %p215 = pneg %p214
    $region22: #{convolution_layer_forward.2} parent=5 // pred_check_branch
      %217 = sbr.rel (%p215) target = $region24
    $region23: #{convolution_layer_forward.2} parent=5 // pred_region
      // Predicated region
      $region25: #{convolution_layer_forward.2} parent=23 // pred_check
        %p218 = pneg %p79
      $region26: #{convolution_layer_forward.2} parent=23 // pred_check_branch
        %220 = sbr.rel (%p218) target = $region28
      $region27: #{convolution_layer_forward.2} parent=23 // pred_region
        %s221 = sadd.s32 %s19, %s20
        %p222 = scmp.lt.s32.totalorder %s221, 1
        %s223 = scalar_select %p222, %s221, 1
        %s224 = smul.addr %s223, 4
        %s225 = smul.addr %s224, 2
        %s226 = scalar_lea.vmem %s1, %s225
        %s227 = sadd.s32 %s19, %s20
      $region28: #{convolution_layer_forward.2} parent=23 // pred_fallthru
        _
    $region24: #{convolution_layer_forward.2} parent=5 // pred_fallthru
      _
    %p228 = scmp.le.s32.totalorder 1, %s12
    %p229 = scmp.lt.s32.totalorder %s12, 3
    %p230 = pnand %p228, %p229
    %p231 = pneg %p230
    // Predicated region
    $region29: #{convolution_layer_forward.2} parent=5 // pred_check
      _
    $region30: #{convolution_layer_forward.2} parent=5 // pred_check_branch
      %233 = sbr.rel (%p230) target = $region32
    $region31: #{convolution_layer_forward.2} parent=5 // pred_region
      %s234 = ssub.s32 %s12, 1
      %s235 = smul.u32 3, %s24
      %p236 = scmp.lt.s32.totalorder %s235, 2
      %s237 = scalar_select %p236, %s235, 2
      %s238 = scalar_lea.vmem %s0, %s237
      %p239 = pneg %p57
      %p240 = pneg %p54
      %s241 = sadd.s32 %s22, %s23
      %p242 = scmp.lt.s32.totalorder %s241, 1
      %s243 = scalar_select %p242, %s241, 1
      %s244 = smul.addr %s243, 4
      %s245 = smul.addr %s244, 2
      %s246 = scalar_lea.vmem %s1, %s245
      %p247 = pneg %p85
      %p248 = pneg %p82
      %p249 = pneg %p106
      %p250 = pneg %p103
      %p251 = pneg %p136
      %p252 = pneg %p133
      %s253 = sadd.s32 %s22, %s23
      %s254 = smul.u32 3, %s24
      %p255 = scmp.lt.s32.totalorder %s253, 1
      %s256 = scalar_select %p255, %s253, 1
      %p257 = scmp.lt.s32.totalorder %s254, 2
      %s258 = scalar_select %p257, %s254, 2
      %s259 = smul.addr %s256, 3
      %s260 = sadd.s32 %s258, %s259
      %s261 = smul.addr %s260, 2
      %s262 = scalar_lea.vmem %s3, %s261
      %p263 = pneg %p162
      %p264 = pneg %p159
      %p265 = scmp.lt.s32.totalorder %s22, 1
      %s266 = scalar_select %p265, %s22, 1
      %s267 = smul.addr %s266, 4
      %s268 = scalar_lea.vmem %s4, %s267
      %p269 = pneg %p188
      %p270 = pneg %p185
      %p271 = scmp.lt.s32.totalorder %s22, 1
      %s272 = scalar_select %p271, %s22, 1
      %s273 = smul.addr %s272, 4
      %s274 = scalar_lea.vmem %s5, %s273
      %s275 = smul.u32 3, %s24
      %p276 = scmp.lt.s32.totalorder %s275, 2
      %s277 = scalar_select %p276, %s275, 2
      %s278 = scalar_lea.vmem %s0, %s277
      %s279 = smul.u32 3, %s24
      %s280 = sadd.s32 %s22, %s23
      %p281 = scmp.lt.s32.totalorder %s280, 1
      %s282 = scalar_select %p281, %s280, 1
      %s283 = smul.addr %s282, 4
      %s284 = smul.addr %s283, 2
      %s285 = scalar_lea.vmem %s1, %s284
      %s286 = sadd.s32 %s22, %s23
      %s287 = sadd.s32 %s22, %s23
      %s288 = smul.u32 3, %s24
      %p289 = scmp.lt.s32.totalorder %s287, 1
      %s290 = scalar_select %p289, %s287, 1
      %p291 = scmp.lt.s32.totalorder %s288, 2
      %s292 = scalar_select %p291, %s288, 2
      %s293 = smul.addr %s290, 3
      %s294 = sadd.s32 %s292, %s293
      %s295 = smul.addr %s294, 2
      %s296 = scalar_lea.vmem %s3, %s295
      %s297 = sadd.s32 %s22, %s23
      %s298 = smul.u32 3, %s24
      %p299 = scmp.lt.s32.totalorder %s22, 1
      %s300 = scalar_select %p299, %s22, 1
      %s301 = smul.addr %s300, 4
      %s302 = scalar_lea.vmem %s4, %s301
      %p303 = scmp.lt.s32.totalorder %s22, 1
      %s304 = scalar_select %p303, %s22, 1
      %s305 = smul.addr %s304, 4
      %s306 = scalar_lea.vmem %s5, %s305
      %p308 = scmp.eq.s32.totalorder %s23, 0
      %p309 = scmp.eq.s32.totalorder %s24, 0
      %p310 = pnand %p308, %p309
      %p311 = pneg %p310
      // Predicated region
      $region33: #{convolution_layer_forward.2} parent=31 // pred_check
        _
      $region34: #{convolution_layer_forward.2} parent=31 // pred_check_branch
        %313 = sbr.rel (%p310) target = $region36
      $region35: #{convolution_layer_forward.2} parent=31 // pred_region
        %vm314 = vcmask 3072
        %315 = vst.msk [vmem:[#allocation3] sm:$0xf] %vm314, 0.0
        %316 = vst.msk [vmem:[#allocation4] sm:$0xf] %vm314, 0.0
      $region36: #{convolution_layer_forward.2} parent=31 // pred_fallthru
        _
      %v317 = vld [vmem:[%s285] sm:$0xff]
      %v318 = vunpack.c.l.bf16 %v317
      %v319 = vunpack.c.h.bf16 %v317
      %322 = vst [vmem:[#allocation1] ss:$2 sm:$0xff] %v318
      %s323 = scalar_lea.vmem [#allocation1], 16
      %324 = vst [vmem:[%s323] ss:$2 sm:$0xff] %v319
      %v325 = vld.sshfl [vmem:[#allocation1] sm:$0xff pattern:$0x75316420]
      %v326 = vld.sshfl [vmem:[#allocation1 + $0x8] sm:$0xff pattern:$0x75316420]
      %v327 = vld.sshfl [vmem:[#allocation1 + $0x10] sm:$0xff pattern:$0x75316420]
      %331 = vst [vmem:[#allocation2] sm:$0xf] %v325
      %332 = vst [vmem:[#allocation2 + $0x8] sm:$0xf] %v326
      %333 = vst [vmem:[#allocation2 + $0x10] sm:$0xf] %v327
      %s334 = scalar_lea.vmem [#allocation1], 1
      %335 = vst [vmem:[%s334] ss:$2 sm:$0xff] %v318
      %s336 = scalar_lea.vmem [#allocation1], 17
      %337 = vst [vmem:[%s336] ss:$2 sm:$0xff] %v319
      %v338 = vld.sshfl [vmem:[#allocation1] sm:$0xff pattern:$0x75316420]
      %v339 = vld.sshfl [vmem:[#allocation1 + $0x8] sm:$0xff pattern:$0x75316420]
      %v340 = vld.sshfl [vmem:[#allocation1 + $0x10] sm:$0xff pattern:$0x75316420]
      %v341 = vld.sshfl [vmem:[#allocation1 + $0x18] sm:$0xff pattern:$0x75316420]
      %342 = vrot.lane.b32.xlu0 %v338, 127
      %v343 = vpop.permute.xlu0 %342
      %344 = vrot.lane.b32.xlu0 %v339, 127
      %v345 = vpop.permute.xlu0 %344
      %346 = vrot.lane.b32.xlu0 %v340, 127
      %v347 = vpop.permute.xlu0 %346
      %348 = vrot.lane.b32.xlu0 %v341, 127
      %v349 = vpop.permute.xlu0 %348
      %vm350 = vcmask 1039360
      %v351 = vsel %vm350, %v343, %v345
      %v352 = vsel %vm350, %v345, %v347
      %v353 = vsel %vm350, %v347, %v349
      %357 = vst [vmem:[#allocation2] sm:$0xf0] %v351
      %358 = vst [vmem:[#allocation2 + $0x8] sm:$0xf0] %v352
      %359 = vst [vmem:[#allocation2 + $0x10] sm:$0xf0] %v353
      %360 = vst [vmem:[#allocation1] ss:$2 sm:$0xff] %v318
      %s361 = scalar_lea.vmem [#allocation1], 16
      %362 = vst [vmem:[%s361] ss:$2 sm:$0xff] %v319
      %v363 = vld.sshfl [vmem:[#allocation1] sm:$0xff pattern:$0x75316420]
      %v364 = vld.sshfl [vmem:[#allocation1 + $0x8] sm:$0xff pattern:$0x75316420]
      %v365 = vld.sshfl [vmem:[#allocation1 + $0x10] sm:$0xff pattern:$0x75316420]
      %v366 = vld.sshfl [vmem:[#allocation1 + $0x18] sm:$0xff pattern:$0x75316420]
      %367 = vrot.lane.b32.xlu0 %v363, 126
      %v368 = vpop.permute.xlu0 %367
      %369 = vrot.lane.b32.xlu0 %v364, 126
      %v370 = vpop.permute.xlu0 %369
      %371 = vrot.lane.b32.xlu0 %v365, 126
      %v372 = vpop.permute.xlu0 %371
      %373 = vrot.lane.b32.xlu0 %v366, 126
      %v374 = vpop.permute.xlu0 %373
      %vm375 = vcmask 1031168
      %v376 = vsel %vm375, %v368, %v370
      %v377 = vsel %vm375, %v370, %v372
      %v378 = vsel %vm375, %v372, %v374
      %382 = vst [vmem:[#allocation2 + $0x18] sm:$0xf] %v376
      %383 = vst [vmem:[#allocation2 + $0x20] sm:$0xf] %v377
      %384 = vst [vmem:[#allocation2 + $0x28] sm:$0xf] %v378
      %s385 = scalar_lea.vmem [#allocation1], 1
      %386 = vst [vmem:[%s385] ss:$2 sm:$0xff] %v318
      %s387 = scalar_lea.vmem [#allocation1], 17
      %388 = vst [vmem:[%s387] ss:$2 sm:$0xff] %v319
      %v389 = vld.sshfl [vmem:[#allocation1] sm:$0xff pattern:$0x75316420]
      %v390 = vld.sshfl [vmem:[#allocation1 + $0x8] sm:$0xff pattern:$0x75316420]
      %v391 = vld.sshfl [vmem:[#allocation1 + $0x10] sm:$0xff pattern:$0x75316420]
      %v392 = vld.sshfl [vmem:[#allocation1 + $0x18] sm:$0xff pattern:$0x75316420]
      %393 = vrot.lane.b32.xlu0 %v389, 110
      %v394 = vpop.permute.xlu0 %393
      %395 = vrot.lane.b32.xlu0 %v390, 110
      %v396 = vpop.permute.xlu0 %395
      %397 = vrot.lane.b32.xlu0 %v391, 110
      %v398 = vpop.permute.xlu0 %397
      %399 = vrot.lane.b32.xlu0 %v392, 110
      %v400 = vpop.permute.xlu0 %399
      %vm401 = vcmask 900096
      %v402 = vsel %vm401, %v394, %v396
      %v403 = vsel %vm401, %v396, %v398
      %v404 = vsel %vm401, %v398, %v400
      %408 = vst [vmem:[#allocation2 + $0x18] sm:$0xf0] %v402
      %409 = vst [vmem:[#allocation2 + $0x20] sm:$0xf0] %v403
      %410 = vst [vmem:[#allocation2 + $0x28] sm:$0xf0] %v404
      %411 = vst [vmem:[#allocation1] ss:$2 sm:$0xff] %v318
      %s412 = scalar_lea.vmem [#allocation1], 16
      %413 = vst [vmem:[%s412] ss:$2 sm:$0xff] %v319
      %v414 = vld.sshfl [vmem:[#allocation1] sm:$0xff pattern:$0x75316420]
      %v415 = vld.sshfl [vmem:[#allocation1 + $0x8] sm:$0xff pattern:$0x75316420]
      %v416 = vld.sshfl [vmem:[#allocation1 + $0x10] sm:$0xff pattern:$0x75316420]
      %v417 = vld.sshfl [vmem:[#allocation1 + $0x18] sm:$0xff pattern:$0x75316420]
      %418 = vrot.lane.b32.xlu0 %v414, 109
      %v419 = vpop.permute.xlu0 %418
      %420 = vrot.lane.b32.xlu0 %v415, 109
      %v421 = vpop.permute.xlu0 %420
      %422 = vrot.lane.b32.xlu0 %v416, 109
      %v423 = vpop.permute.xlu0 %422
      %424 = vrot.lane.b32.xlu0 %v417, 109
      %v425 = vpop.permute.xlu0 %424
      %vm426 = vcmask 891904
      %v427 = vsel %vm426, %v419, %v421
      %v428 = vsel %vm426, %v421, %v423
      %v429 = vsel %vm426, %v423, %v425
      %433 = vst [vmem:[#allocation2 + $0x30] sm:$0xf] %v427
      %434 = vst [vmem:[#allocation2 + $0x38] sm:$0xf] %v428
      %435 = vst [vmem:[#allocation2 + $0x40] sm:$0xf] %v429
      %s436 = scalar_lea.vmem [#allocation1], 1
      %437 = vst [vmem:[%s436] ss:$2 sm:$0xff] %v318
      %s438 = scalar_lea.vmem [#allocation1], 17
      %439 = vst [vmem:[%s438] ss:$2 sm:$0xff] %v319
      %v440 = vld.sshfl [vmem:[#allocation1] sm:$0xff pattern:$0x75316420]
      %v441 = vld.sshfl [vmem:[#allocation1 + $0x8] sm:$0xff pattern:$0x75316420]
      %v442 = vld.sshfl [vmem:[#allocation1 + $0x10] sm:$0xff pattern:$0x75316420]
      %v443 = vld.sshfl [vmem:[#allocation1 + $0x18] sm:$0xff pattern:$0x75316420]
      %444 = vrot.lane.b32.xlu0 %v440, 108
      %v445 = vpop.permute.xlu0 %444
      %446 = vrot.lane.b32.xlu0 %v441, 108
      %v447 = vpop.permute.xlu0 %446
      %448 = vrot.lane.b32.xlu0 %v442, 108
      %v449 = vpop.permute.xlu0 %448
      %450 = vrot.lane.b32.xlu0 %v443, 108
      %v451 = vpop.permute.xlu0 %450
      %vm452 = vcmask 883712
      %v453 = vsel %vm452, %v445, %v447
      %v454 = vsel %vm452, %v447, %v449
      %v455 = vsel %vm452, %v449, %v451
      %459 = vst [vmem:[#allocation2 + $0x30] sm:$0xf0] %v453
      %460 = vst [vmem:[#allocation2 + $0x38] sm:$0xf0] %v454
      %461 = vst [vmem:[#allocation2 + $0x40] sm:$0xf0] %v455
      %462 = vst [vmem:[#allocation1] ss:$2 sm:$0xff] %v318
      %s463 = scalar_lea.vmem [#allocation1], 16
      %464 = vst [vmem:[%s463] ss:$2 sm:$0xff] %v319
      %v465 = vld.sshfl [vmem:[#allocation1] sm:$0xff pattern:$0x75316420]
      %v466 = vld.sshfl [vmem:[#allocation1 + $0x8] sm:$0xff pattern:$0x75316420]
      %v467 = vld.sshfl [vmem:[#allocation1 + $0x10] sm:$0xff pattern:$0x75316420]
      %v468 = vld.sshfl [vmem:[#allocation1 + $0x18] sm:$0xff pattern:$0x75316420]
      %469 = vrot.lane.b32.xlu0 %v465, 92
      %v470 = vpop.permute.xlu0 %469
      %471 = vrot.lane.b32.xlu0 %v466, 92
      %v472 = vpop.permute.xlu0 %471
      %473 = vrot.lane.b32.xlu0 %v467, 92
      %v474 = vpop.permute.xlu0 %473
      %475 = vrot.lane.b32.xlu0 %v468, 92
      %v476 = vpop.permute.xlu0 %475
      %vm477 = vcmask 752640
      %v478 = vsel %vm477, %v470, %v472
      %v479 = vsel %vm477, %v472, %v474
      %v480 = vsel %vm477, %v474, %v476
      %484 = vst [vmem:[#allocation2 + $0x48] sm:$0xf] %v478
      %485 = vst [vmem:[#allocation2 + $0x50] sm:$0xf] %v479
      %486 = vst [vmem:[#allocation2 + $0x58] sm:$0xf] %v480
      %s487 = scalar_lea.vmem [#allocation1], 1
      %488 = vst [vmem:[%s487] ss:$2 sm:$0xff] %v318
      %s489 = scalar_lea.vmem [#allocation1], 17
      %490 = vst [vmem:[%s489] ss:$2 sm:$0xff] %v319
      %v491 = vld.sshfl [vmem:[#allocation1] sm:$0xff pattern:$0x75316420]
      %v492 = vld.sshfl [vmem:[#allocation1 + $0x8] sm:$0xff pattern:$0x75316420]
      %v493 = vld.sshfl [vmem:[#allocation1 + $0x10] sm:$0xff pattern:$0x75316420]
      %v494 = vld.sshfl [vmem:[#allocation1 + $0x18] sm:$0xff pattern:$0x75316420]
      %495 = vrot.lane.b32.xlu0 %v491, 91
      %v496 = vpop.permute.xlu0 %495
      %497 = vrot.lane.b32.xlu0 %v492, 91
      %v498 = vpop.permute.xlu0 %497
      %499 = vrot.lane.b32.xlu0 %v493, 91
      %v500 = vpop.permute.xlu0 %499
      %501 = vrot.lane.b32.xlu0 %v494, 91
      %v502 = vpop.permute.xlu0 %501
      %vm503 = vcmask 744448
      %v504 = vsel %vm503, %v496, %v498
      %v505 = vsel %vm503, %v498, %v500
      %v506 = vsel %vm503, %v500, %v502
      %510 = vst [vmem:[#allocation2 + $0x48] sm:$0xf0] %v504
      %511 = vst [vmem:[#allocation2 + $0x50] sm:$0xf0] %v505
      %512 = vst [vmem:[#allocation2 + $0x58] sm:$0xf0] %v506
      %513 = vst [vmem:[#allocation1] ss:$2 sm:$0xff] %v318
      %s514 = scalar_lea.vmem [#allocation1], 16
      %515 = vst [vmem:[%s514] ss:$2 sm:$0xff] %v319
      %v516 = vld.sshfl [vmem:[#allocation1] sm:$0xff pattern:$0x75316420]
      %v517 = vld.sshfl [vmem:[#allocation1 + $0x8] sm:$0xff pattern:$0x75316420]
      %v518 = vld.sshfl [vmem:[#allocation1 + $0x10] sm:$0xff pattern:$0x75316420]
      %v519 = vld.sshfl [vmem:[#allocation1 + $0x18] sm:$0xff pattern:$0x75316420]
      %520 = vrot.lane.b32.xlu0 %v516, 90
      %v521 = vpop.permute.xlu0 %520
      %522 = vrot.lane.b32.xlu0 %v517, 90
      %v523 = vpop.permute.xlu0 %522
      %524 = vrot.lane.b32.xlu0 %v518, 90
      %v525 = vpop.permute.xlu0 %524
      %526 = vrot.lane.b32.xlu0 %v519, 90
      %v527 = vpop.permute.xlu0 %526
      %vm528 = vcmask 736256
      %v529 = vsel %vm528, %v521, %v523
      %v530 = vsel %vm528, %v523, %v525
      %v531 = vsel %vm528, %v525, %v527
      %535 = vst [vmem:[#allocation2 + $0x60] sm:$0xf] %v529
      %536 = vst [vmem:[#allocation2 + $0x68] sm:$0xf] %v530
      %537 = vst [vmem:[#allocation2 + $0x70] sm:$0xf] %v531
      %v538 = vld [vmem:[%s2] sm:$0x3]
      %v539 = vld [vmem:[#allocation2] sm:$0xff]
      %v540 = vld [vmem:[#allocation2 + $0x8] sm:$0xff]
      %v541 = vld [vmem:[#allocation2 + $0x10] sm:$0xff]
      %v542 = vld [vmem:[#allocation2 + $0x18] sm:$0xff]
      %v543 = vld [vmem:[#allocation2 + $0x20] sm:$0xff]
      %v544 = vld [vmem:[#allocation2 + $0x28] sm:$0xff]
      %v545 = vld [vmem:[#allocation2 + $0x30] sm:$0xff]
      %v546 = vld [vmem:[#allocation2 + $0x38] sm:$0xff]
      %v547 = vld [vmem:[#allocation2 + $0x40] sm:$0xff]
      %v548 = vld [vmem:[#allocation2 + $0x48] sm:$0xff]
      %v549 = vld [vmem:[#allocation2 + $0x50] sm:$0xff]
      %v550 = vld [vmem:[#allocation2 + $0x58] sm:$0xff]
      %v551 = vld [vmem:[#allocation2 + $0x60] sm:$0xf]
      %v552 = vld [vmem:[#allocation2 + $0x68] sm:$0xf]
      %v553 = vld [vmem:[#allocation2 + $0x70] sm:$0xf]
      %v554 = vpack.c.bf16 %v542, %v539
      %v555 = vpack.c.bf16 %v543, %v540
      %v556 = vpack.c.bf16 %v544, %v541
      %v557 = vpack.c.bf16 %v548, %v545
      %v558 = vpack.c.bf16 %v549, %v546
      %v559 = vpack.c.bf16 %v550, %v547
      %v560 = vpack.c.bf16 %v551, %v551
      %v561 = vpack.c.bf16 %v552, %v552
      %v562 = vpack.c.bf16 %v553, %v553
      %vm563 = vcmask 293888
      %v565 = vsel %vm563, %v538, 0
      %vm567 = vcmask 1041408
      %v569 = vsel %vm567, %v560, 0
      %v572 = vsel %vm567, %v561, 0
      %v575 = vsel %vm567, %v562, 0
      %577 = vmatpush.bf16.msra.mxu0 0
      %578 = vmatpush.bf16.msra.mxu0 0
      %579 = vmatpush.bf16.msra.mxu0 0
      %580 = vmatpush.bf16.msra.mxu0 0
      %581 = vmatpush.bf16.msra.mxu0 0
      %582 = vmatpush.bf16.msra.mxu0 %v569
      %583 = vmatpush.bf16.msra.mxu0 %v557
      %584 = vmatpush.bf16.msra.mxu0 %v554
      %585 = vmatmul.bf16.gmra.mxu0 %v565
      %v586 = vpop.f32.mrf.mxu0
      %v587 = vadd.f32 0.0, %v586
      %v588 = vpop.f32.mrf.mxu0
      %589 = vdwg.mxu0
      %590 = vmatpush.bf16.msra.mxu0 0
      %591 = vmatpush.bf16.msra.mxu0 0
      %592 = vmatpush.bf16.msra.mxu0 0
      %593 = vmatpush.bf16.msra.mxu0 0
      %594 = vmatpush.bf16.msra.mxu0 0
      %595 = vmatpush.bf16.msra.mxu0 %v572
      %596 = vmatpush.bf16.msra.mxu0 %v558
      %597 = vmatpush.bf16.msra.mxu0 %v555
      %598 = vmatmul.bf16.gmra.mxu0 %v565
      %v599 = vpop.f32.mrf.mxu0
      %v600 = vadd.f32 0.0, %v599
      %v601 = vpop.f32.mrf.mxu0
      %602 = vdwg.mxu0
      %603 = vmatpush.bf16.msra.mxu0 0
      %604 = vmatpush.bf16.msra.mxu0 0
      %605 = vmatpush.bf16.msra.mxu0 0
      %606 = vmatpush.bf16.msra.mxu0 0
      %607 = vmatpush.bf16.msra.mxu0 0
      %608 = vmatpush.bf16.msra.mxu0 %v575
      %609 = vmatpush.bf16.msra.mxu0 %v559
      %610 = vmatpush.bf16.msra.mxu0 %v556
      %611 = vmatmul.bf16.gmra.mxu0 %v565
      %v612 = vpop.f32.mrf.mxu0
      %v613 = vadd.f32 0.0, %v612
      %v614 = vpop.f32.mrf.mxu0
      %615 = vdwg.mxu0
      %v616 = vpack.c.bf16 %v600, %v587
      %v617 = vpack.c.bf16 %v613, %v613
      %v620 = vrot.slane %v616, 2
      %v621 = vrot.slane %v617, 4
      %v622 = vrot.slane %v617, 6
      %v625 = vsel %vm567, %v616, %v620
      %vm626 = vcmask 1045508
      %v629 = vsel %vm626, %v621, %v622
      %vm630 = vcmask 1043456
      %v631 = vsel %vm630, %v625, %v629
      %633 = vst [vmem:[%s296] sm:$0x3f] %v631
      %v634 = vld [vmem:[%s278] sm:$0x7]
      %v636 = vperm.slane %v634, 0
      %v637 = vperm.slane %v634, 1
      %v638 = vperm.slane %v634, 2
      %v642 = vmul.f32 %v587, %v636
      %v643 = vmul.f32 %v600, %v637
      %v644 = vmul.f32 %v613, %v638
      %v645 = vld [vmem:[#allocation3] sm:$0xf]
      %v646 = vsel %vm630, %v642, 0.0
      %v647 = vsel %vm630, %v643, 0.0
      %v648 = vadd.f32 %v646, %v647
      %v649 = vsel %vm630, %v644, 0.0
      %v650 = vadd.f32 %v648, %v649
      %651 = vadd.xlane.f32.xlu0 %v650
      %v652 = vpop.xlane.xlu0 %651
      %v653 = vadd.f32 %v645, %v652
      %vm654 = vcmask 3072
      %655 = vst.msk [vmem:[#allocation3] sm:$0xf] %vm654, %v653
      %v656 = vld [vmem:[#allocation4] sm:$0xf]
      %v657 = vmul.f32 %v642, %v587
      %v658 = vmul.f32 %v643, %v600
      %v659 = vmul.f32 %v644, %v613
      %v660 = vsel %vm630, %v657, 0.0
      %v661 = vsel %vm630, %v658, 0.0
      %v662 = vadd.f32 %v660, %v661
      %v663 = vsel %vm630, %v659, 0.0
      %v664 = vadd.f32 %v662, %v663
      %665 = vadd.xlane.f32.xlu0 %v664
      %v666 = vpop.xlane.xlu0 %665
      %v667 = vadd.f32 %v656, %v666
      %668 = vst.msk [vmem:[#allocation4] sm:$0xf] %vm654, %v667
      // Predicated region
      $region37: #{convolution_layer_forward.2} parent=31 // pred_check
        _
      $region38: #{convolution_layer_forward.2} parent=31 // pred_check_branch
        %670 = sbr.rel (%p310) target = $region40
      $region39: #{convolution_layer_forward.2} parent=31 // pred_region
        %v671 = vld [vmem:[#allocation3] sm:$0xf]
        %672 = vst.msk [vmem:[%s302] sm:$0xf] %vm654, %v671
        %v673 = vld [vmem:[#allocation4] sm:$0xf]
        %674 = vst.msk [vmem:[%s306] sm:$0xf] %vm654, %v673
      $region40: #{convolution_layer_forward.2} parent=31 // pred_fallthru
        _
      %s675 = sadd.s32 %s22, %s23
      %s676 = smul.u32 3, %s24
      %p677 = scmp.lt.s32.totalorder %s675, 1
      %s678 = scalar_select %p677, %s675, 1
      %p679 = scmp.lt.s32.totalorder %s676, 2
      %s680 = scalar_select %p679, %s676, 2
      %s681 = smul.addr %s678, 3
      %s682 = sadd.s32 %s680, %s681
      %s683 = smul.addr %s682, 2
      %s684 = scalar_lea.vmem %s3, %s683
      %p685 = scmp.lt.s32.totalorder %s22, 1
      %s686 = scalar_select %p685, %s22, 1
      %s687 = smul.addr %s686, 4
      %s688 = scalar_lea.vmem %s4, %s687
      %p689 = scmp.lt.s32.totalorder %s22, 1
      %s690 = scalar_select %p689, %s22, 1
      %s691 = smul.addr %s690, 4
      %s692 = scalar_lea.vmem %s5, %s691
      // Predicated region
      $region41: #{convolution_layer_forward.2} parent=31 // pred_check
        %p693 = pneg %p133
      $region42: #{convolution_layer_forward.2} parent=31 // pred_check_branch
        %695 = sbr.rel (%p693) target = $region44
      $region43: #{convolution_layer_forward.2} parent=31 // pred_region
        %s696 = sadd.s32 %s22, %s23
        %s697 = smul.u32 3, %s24
      $region44: #{convolution_layer_forward.2} parent=31 // pred_fallthru
        _
      // Predicated region
      $region45: #{convolution_layer_forward.2} parent=31 // pred_check
        %p698 = pneg %p159
      $region46: #{convolution_layer_forward.2} parent=31 // pred_check_branch
        %700 = sbr.rel (%p698) target = $region48
      $region47: #{convolution_layer_forward.2} parent=31 // pred_region
        _
      $region48: #{convolution_layer_forward.2} parent=31 // pred_fallthru
        _
      // Predicated region
      $region49: #{convolution_layer_forward.2} parent=31 // pred_check
        %p701 = pneg %p185
      $region50: #{convolution_layer_forward.2} parent=31 // pred_check_branch
        %703 = sbr.rel (%p701) target = $region52
      $region51: #{convolution_layer_forward.2} parent=31 // pred_region
        _
      $region52: #{convolution_layer_forward.2} parent=31 // pred_fallthru
        _
    $region32: #{convolution_layer_forward.2} parent=5 // pred_fallthru
      _
    %p704 = scmp.le.s32.totalorder 2, %s12
    // Predicated region
    $region53: #{convolution_layer_forward.2} parent=5 // pred_check
      %p705 = pneg %p704
    $region54: #{convolution_layer_forward.2} parent=5 // pred_check_branch
      %707 = sbr.rel (%p705) target = $region56
    $region55: #{convolution_layer_forward.2} parent=5 // pred_region
      %s708 = ssub.s32 %s12, 2
      // Predicated region
      $region57: #{convolution_layer_forward.2} parent=55 // pred_check
        %p709 = pneg %p139
      $region58: #{convolution_layer_forward.2} parent=55 // pred_check_branch
        %711 = sbr.rel (%p709) target = $region60
      $region59: #{convolution_layer_forward.2} parent=55 // pred_region
        %s712 = sadd.s32 %s25, %s26
        %s713 = smul.u32 3, %s27
        %p714 = scmp.lt.s32.totalorder %s712, 1
        %s715 = scalar_select %p714, %s712, 1
        %p716 = scmp.lt.s32.totalorder %s713, 2
        %s717 = scalar_select %p716, %s713, 2
        %s718 = smul.addr %s715, 3
        %s719 = sadd.s32 %s717, %s718
        %s720 = smul.addr %s719, 2
        %s721 = scalar_lea.vmem %s3, %s720
      $region60: #{convolution_layer_forward.2} parent=55 // pred_fallthru
        _
      // Predicated region
      $region61: #{convolution_layer_forward.2} parent=55 // pred_check
        %p722 = pneg %p165
      $region62: #{convolution_layer_forward.2} parent=55 // pred_check_branch
        %724 = sbr.rel (%p722) target = $region64
      $region63: #{convolution_layer_forward.2} parent=55 // pred_region
        %p725 = scmp.lt.s32.totalorder %s25, 1
        %s726 = scalar_select %p725, %s25, 1
        %s727 = smul.addr %s726, 4
        %s728 = scalar_lea.vmem %s4, %s727
      $region64: #{convolution_layer_forward.2} parent=55 // pred_fallthru
        _
      // Predicated region
      $region65: #{convolution_layer_forward.2} parent=55 // pred_check
        %p729 = pneg %p191
      $region66: #{convolution_layer_forward.2} parent=55 // pred_check_branch
        %731 = sbr.rel (%p729) target = $region68
      $region67: #{convolution_layer_forward.2} parent=55 // pred_region
        %p732 = scmp.lt.s32.totalorder %s25, 1
        %s733 = scalar_select %p732, %s25, 1
        %s734 = smul.addr %s733, 4
        %s735 = scalar_lea.vmem %s5, %s734
      $region68: #{convolution_layer_forward.2} parent=55 // pred_fallthru
        _
    $region56: #{convolution_layer_forward.2} parent=5 // pred_fallthru
      _
  $region6: #{convolution_layer_forward.2} parent=0 // loop_footer
    %s16 = sadd.s32 1, %s12
  $region7: #{convolution_layer_forward.2} parent=0 // loop_footer_branch
    %11 = sbr.rel target = $region3
  $region8: #{convolution_layer_forward.2} parent=0 // loop_exit
    _

</llo_original>
